<compile_context>
chip_gen: v5e
topology: v5e:2x2
jax: 0.10.0
libtpu: 0.0.40
codegen_flags: <defaults>
</compile_context>

<pallas_src>
import functools

import jax
import jax.numpy as jnp
from jax.experimental import pallas as pl
from jax.experimental.pallas import tpu as pltpu


def _round_up(x, m):
    return ((x + m - 1) // m) * m


def _batch_tile(batch):
    """Rows of `features` processed per grid step.

    cdiv-based tiling (no divisibility requirement): a fixed 256-row tile keeps sublanes full,
    amortizes the ~0.35us/step overhead, and stays far inside even v7x's 64 MiB VMEM at these
    feature widths.  When the batch is large enough we force >= 2 grid steps so the "parallel"
    batch axis can shard across v7x's two TensorCores (harmless on single-TC v5e/v6e).
    """
    if batch <= 8:
        return batch
    return min(256, _round_up((batch + 1) // 2, 8))


def _fused_kernel(x_ref, t_ref, m_ref, w_ref, b_ref, pi_ref, vf_ref, z_ref):
    """One grid step: a (Bt, D) features tile -> strict-upper-triangle Gram + value latent."""
    h = t_ref.shape[0]          # hidden_dim  (H)
    d = x_ref.shape[1]          # feature_dim (D = N*H)
    n = d // h                  # asset_num   (N)

    x = x_ref[...]              # (Bt, D) f32 — loaded once, shared by both heads
    t = t_ref[...]              # (H, D) one-hot repeat matrix — hoisted out of the loop

    # ---------------- policy head ------------------------------------------------------------
    # z[:, i*D + j*H + h'] = F[b,i,h'] * F[b,j,h'];   pi = z @ M   (M folded on the host).
    # A single K = N*D bf16 matmul with a 128-lane output replaces the old per-asset chain of
    # K=32 / K-out=8 / K=8 matmuls; the MXU accumulates over K internally, so there is no
    # loop-carried (Bt, 128) f32 accumulator living in vregs.
    for i in range(n):                                                 # static unroll; N is small
        f_i = x[:, i * h:(i + 1) * h]                                  # (Bt, H) slice of loaded tile
        # TODO(synk): this expansion is pure data movement; move it off the MXU (lane tile / roll)
        # if the MXU push slot ever becomes the binding unit.
        e_i = jnp.dot(f_i, t, preferred_element_type=jnp.float32)      # (Bt, D): f_i tiled per asset
        z_ref[:, i * d:(i + 1) * d] = (e_i * x).astype(z_ref.dtype)    # f32 product, bf16 store
    pi_ref[...] = jnp.dot(z_ref[...], m_ref[...], preferred_element_type=jnp.float32)

    # ---------------- value head --------------------------------------------------------------
    # relu(x @ W + b); W/bias zero-padded to a 128-lane output so the store is unmasked.
    # TODO(synk): K-tile W with a VMEM f32 accumulator (pl.when init/finalize) once
    # D = asset_num*hidden_dim grows past a few thousand (threshold ~2x lower on v7x's 64 MiB VMEM).
    y = jnp.dot(x.astype(w_ref.dtype), w_ref[...], preferred_element_type=jnp.float32) + b_ref[...]
    vf_ref[...] = jnp.maximum(y, 0.0)


def _policy_constants(asset_num, hidden_dim, p_pad):
    """Host-side one-hot constants: T (repeat expansion) and the folded pair-selection matrix M."""
    n, h = asset_num, hidden_dim
    d = n * h
    col = jnp.arange(d)
    # T[h', j*H + h] = 1 iff h == h'  -> e_i = f_i @ T tiles f_i across the N asset blocks, (H, D)
    t_mat = (col[None, :] % h == jnp.arange(h)[:, None]).astype(jnp.float32)
    # M[i*D + j*H + h, p] = 1 iff (i, j) is the p-th strict-upper-triangle pair, (N*D, P_pad).
    # This is the old seg @ sel chain folded into one constant: the in-kernel contraction becomes
    # a single full-K matmul with a lane-dense output instead of two tiny (K<=32, 8-lane) ones.
    iu_i, iu_j = jnp.triu_indices(n, k=1)
    num_pairs = int(iu_i.shape[0])
    m = jnp.zeros((n * d, p_pad), jnp.float32)
    if num_pairs > 0:
        rows = (iu_i * d + iu_j * h)[:, None] + jnp.arange(h)[None, :]            # (P, H)
        cols = jnp.broadcast_to(jnp.arange(num_pairs)[:, None], (num_pairs, h))   # (P, H)
        m = m.at[rows.reshape(-1), cols.reshape(-1)].set(1.0)
    return t_mat, m.astype(jnp.bfloat16)


def pair_selection_forward(features, params, asset_num, hidden_dim):
    """features: (B, asset_num*hidden_dim) float32 -> (latent_pi, latent_vf)."""
    batch, feat_dim = features.shape
    assert feat_dim == asset_num * hidden_dim
    w_vf, b_vf = params["w_vf"], params["b_vf"]
    vf_dim = w_vf.shape[1]

    num_pairs = asset_num * (asset_num - 1) // 2
    p_pad = _round_up(max(num_pairs, 1), 128)      # lane-dense policy output width
    vf_pad = _round_up(vf_dim, 128)                # lane-dense value output width (unmasked vst)
    t_mat, m = _policy_constants(asset_num, hidden_dim, p_pad)

    # bf16 at the MXU inputs (f32 accumulation) for the two big matmuls; zero-pad W/b to 128 lanes.
    w_pad = jnp.zeros((feat_dim, vf_pad), jnp.bfloat16).at[:, :vf_dim].set(w_vf.astype(jnp.bfloat16))
    b_pad = jnp.zeros((1, vf_pad), jnp.float32).at[:, :vf_dim].set(b_vf.reshape(1, vf_dim))

    bt = _batch_tile(batch)
    grid = (pl.cdiv(batch, bt),)

    pi_pad, vf_out = pl.pallas_call(
        _fused_kernel,
        out_shape=(
            jax.ShapeDtypeStruct((batch, p_pad), jnp.float32),
            jax.ShapeDtypeStruct((batch, vf_pad), jnp.float32),
        ),
        grid_spec=pltpu.PrefetchScalarGridSpec(
            num_scalar_prefetch=0,
            grid=grid,
            in_specs=[
                pl.BlockSpec((bt, feat_dim), lambda i: (i, 0)),                   # features tile
                # TODO(synk): single-buffer the grid-invariant operands below
                # (pipeline_mode=pl.Buffered(1)) if D*vf grows under v7x's 64 MiB VMEM budget.
                pl.BlockSpec((hidden_dim, feat_dim), lambda i: (0, 0)),           # T (one-hot, f32)
                pl.BlockSpec((asset_num * feat_dim, p_pad), lambda i: (0, 0)),    # folded M (bf16)
                pl.BlockSpec((feat_dim, vf_pad), lambda i: (0, 0)),               # value W (bf16)
                pl.BlockSpec((1, vf_pad), lambda i: (0, 0)),                      # value bias (f32)
            ],
            out_specs=[
                pl.BlockSpec((bt, p_pad), lambda i: (i, 0)),                      # pair logits
                pl.BlockSpec((bt, vf_pad), lambda i: (i, 0)),                     # value latent
            ],
            scratch_shapes=[pltpu.VMEM((bt, asset_num * feat_dim), jnp.bfloat16)],  # z (policy LHS)
        ),
        compiler_params=pltpu.CompilerParams(
            dimension_semantics=("parallel",),
            vmem_limit_bytes=32 * 1024 * 1024,
        ),
    )(features, t_mat, m, w_pad, b_pad)

    latent_pi = pi_pad[:, :num_pairs]   # drop lane padding (cheap contiguous slices)
    latent_vf = vf_out[:, :vf_dim]
    return latent_pi, latent_vf


def init_params(key, asset_num, hidden_dim, last_layer_dim_vf):
    """Deterministic init mimicking nn.Linear defaults (uniform +/- 1/sqrt(fan_in))."""
    d = asset_num * hidden_dim
    k_w, k_b = jax.random.split(key)
    bound = 1.0 / jnp.sqrt(jnp.float32(d))
    w_vf = jax.random.uniform(k_w, (d, last_layer_dim_vf), jnp.float32, minval=-bound, maxval=bound)
    b_vf = jax.random.uniform(k_b, (1, last_layer_dim_vf), jnp.float32, minval=-bound, maxval=bound)
    return {"w_vf": w_vf, "b_vf": b_vf}


if __name__ == "__main__":
    # Small shapes consistent with the module.
    batch = 2
    asset_num = 8            # N
    hidden_dim = 32          # M
    feature_dim = asset_num * hidden_dim
    last_layer_dim_vf = 64

    key = jax.random.PRNGKey(0)
    k_feat, k_params = jax.random.split(key)
    features = jax.random.normal(k_feat, (batch, feature_dim), jnp.float32)
    params = init_params(k_params, asset_num, hidden_dim, last_layer_dim_vf)

    fwd = jax.jit(functools.partial(pair_selection_forward,
                                    asset_num=asset_num, hidden_dim=hidden_dim))
    latent_pi, latent_vf = fwd(features, params)
    jax.block_until_ready((latent_pi, latent_vf))

    # Reference check in plain JAX (tolerances account for bf16 MXU inputs / f32 accumulation).
    f_bnh = features.reshape(batch, asset_num, hidden_dim)
    att_ref = jnp.einsum("bnh,bmh->bnm", f_bnh, f_bnh)
    iu = jnp.triu_indices(asset_num, k=1)
    pi_ref = att_ref[:, iu[0], iu[1]]
    vf_ref = jnp.maximum(features @ params["w_vf"] + params["b_vf"], 0.0)

    num_pairs = asset_num * (asset_num - 1) // 2
    assert latent_pi.shape == (batch, num_pairs)
    assert latent_vf.shape == (batch, last_layer_dim_vf)
    assert jnp.allclose(latent_pi, pi_ref, atol=2e-1, rtol=2e-2)
    assert jnp.allclose(latent_vf, vf_ref, atol=5e-2, rtol=2e-2)

    print("KERNEL_OK")
</pallas_src>

<mosaic_0001>
module attributes {stable_mosaic.version = 11 : i64} {
  func.func @_fused_kernel(%arg0: i32, %arg1: memref<2x256xf32, #tpu.memory_space<vmem>>, %arg2: memref<32x256xf32, #tpu.memory_space<vmem>>, %arg3: memref<2048x128xbf16, #tpu.memory_space<vmem>>, %arg4: memref<256x128xbf16, #tpu.memory_space<vmem>>, %arg5: memref<1x128xf32, #tpu.memory_space<vmem>>, %arg6: memref<2x128xf32, #tpu.memory_space<vmem>>, %arg7: memref<2x128xf32, #tpu.memory_space<vmem>>, %arg8: memref<2x2048xbf16, #tpu.memory_space<vmem>>) attributes {dimension_semantics = [#tpu.dimension_semantics<parallel>], iteration_bounds = array<i64: 1>, scalar_prefetch = 0 : i64, scratch_operands = 1 : i64, tpu.core_type = #tpu.core_type<tc>, window_params = [{transform_indices = @transform_0, window_bounds = array<i64: 2, 256>}, {pipeline_mode = #tpu.pipeline_mode<synchronous>, transform_indices = @transform_1, window_bounds = array<i64: 32, 256>}, {pipeline_mode = #tpu.pipeline_mode<synchronous>, transform_indices = @transform_2, window_bounds = array<i64: 2048, 128>}, {pipeline_mode = #tpu.pipeline_mode<synchronous>, transform_indices = @transform_3, window_bounds = array<i64: 256, 128>}, {pipeline_mode = #tpu.pipeline_mode<synchronous>, transform_indices = @transform_4, window_bounds = array<i64: 1, 128>}, {transform_indices = @transform_5, window_bounds = array<i64: 2, 128>}, {transform_indices = @transform_6, window_bounds = array<i64: 2, 128>}]} {
    %c0 = arith.constant 0 : index
    %c0_0 = arith.constant 0 : index
    %0 = vector.load %arg1[%c0, %c0_0] : memref<2x256xf32, #tpu.memory_space<vmem>>, vector<2x256xf32>
    %c0_1 = arith.constant 0 : index
    %c0_2 = arith.constant 0 : index
    %1 = vector.load %arg2[%c0_1, %c0_2] : memref<32x256xf32, #tpu.memory_space<vmem>>, vector<32x256xf32>
    %2 = vector.extract_strided_slice %0 {offsets = [0, 0], sizes = [2, 32], strides = [1, 1]} : vector<2x256xf32> to vector<2x32xf32>
    %cst = arith.constant dense<0.000000e+00> : vector<2x256xf32>
    %3 = tpu.matmul %2, %1, %cst {dimension_numbers = #tpu.dot_dimension_numbers<[1], [0], [0], [1], [0, 0, 1, 1], [], []>} : vector<2x32xf32>, vector<32x256xf32>, vector<2x256xf32> -> vector<2x256xf32>
    %4 = arith.mulf %3, %0 : vector<2x256xf32>
    %5 = arith.truncf %4 : vector<2x256xf32> to vector<2x256xbf16>
    %c0_3 = arith.constant 0 : index
    %c0_4 = arith.constant 0 : index
    %6 = vector.load %arg8[%c0_3, %c0_4] : memref<2x2048xbf16, #tpu.memory_space<vmem>>, vector<2x256xbf16>
    tpu.vector_store %arg8[%c0_3, %c0_4], %5 {strides = array<i32>} : memref<2x2048xbf16, #tpu.memory_space<vmem>>, vector<2x256xbf16>,
    %7 = vector.extract_strided_slice %0 {offsets = [0, 32], sizes = [2, 32], strides = [1, 1]} : vector<2x256xf32> to vector<2x32xf32>
    %cst_5 = arith.constant dense<0.000000e+00> : vector<2x256xf32>
    %8 = tpu.matmul %7, %1, %cst_5 {dimension_numbers = #tpu.dot_dimension_numbers<[1], [0], [0], [1], [0, 0, 1, 1], [], []>} : vector<2x32xf32>, vector<32x256xf32>, vector<2x256xf32> -> vector<2x256xf32>
    %9 = arith.mulf %8, %0 : vector<2x256xf32>
    %10 = arith.truncf %9 : vector<2x256xf32> to vector<2x256xbf16>
    %c0_6 = arith.constant 0 : index
    %c256 = arith.constant 256 : index
    %11 = vector.load %arg8[%c0_6, %c256] : memref<2x2048xbf16, #tpu.memory_space<vmem>>, vector<2x256xbf16>
    tpu.vector_store %arg8[%c0_6, %c256], %10 {strides = array<i32>} : memref<2x2048xbf16, #tpu.memory_space<vmem>>, vector<2x256xbf16>,
    %12 = vector.extract_strided_slice %0 {offsets = [0, 64], sizes = [2, 32], strides = [1, 1]} : vector<2x256xf32> to vector<2x32xf32>
    %cst_7 = arith.constant dense<0.000000e+00> : vector<2x256xf32>
    %13 = tpu.matmul %12, %1, %cst_7 {dimension_numbers = #tpu.dot_dimension_numbers<[1], [0], [0], [1], [0, 0, 1, 1], [], []>} : vector<2x32xf32>, vector<32x256xf32>, vector<2x256xf32> -> vector<2x256xf32>
    %14 = arith.mulf %13, %0 : vector<2x256xf32>
    %15 = arith.truncf %14 : vector<2x256xf32> to vector<2x256xbf16>
    %c0_8 = arith.constant 0 : index
    %c512 = arith.constant 512 : index
    %16 = vector.load %arg8[%c0_8, %c512] : memref<2x2048xbf16, #tpu.memory_space<vmem>>, vector<2x256xbf16>
    tpu.vector_store %arg8[%c0_8, %c512], %15 {strides = array<i32>} : memref<2x2048xbf16, #tpu.memory_space<vmem>>, vector<2x256xbf16>,
    %17 = vector.extract_strided_slice %0 {offsets = [0, 96], sizes = [2, 32], strides = [1, 1]} : vector<2x256xf32> to vector<2x32xf32>
    %cst_9 = arith.constant dense<0.000000e+00> : vector<2x256xf32>
    %18 = tpu.matmul %17, %1, %cst_9 {dimension_numbers = #tpu.dot_dimension_numbers<[1], [0], [0], [1], [0, 0, 1, 1], [], []>} : vector<2x32xf32>, vector<32x256xf32>, vector<2x256xf32> -> vector<2x256xf32>
    %19 = arith.mulf %18, %0 : vector<2x256xf32>
    %20 = arith.truncf %19 : vector<2x256xf32> to vector<2x256xbf16>
    %c0_10 = arith.constant 0 : index
    %c768 = arith.constant 768 : index
    %21 = vector.load %arg8[%c0_10, %c768] : memref<2x2048xbf16, #tpu.memory_space<vmem>>, vector<2x256xbf16>
    tpu.vector_store %arg8[%c0_10, %c768], %20 {strides = array<i32>} : memref<2x2048xbf16, #tpu.memory_space<vmem>>, vector<2x256xbf16>,
    %22 = vector.extract_strided_slice %0 {offsets = [0, 128], sizes = [2, 32], strides = [1, 1]} : vector<2x256xf32> to vector<2x32xf32>
    %cst_11 = arith.constant dense<0.000000e+00> : vector<2x256xf32>
    %23 = tpu.matmul %22, %1, %cst_11 {dimension_numbers = #tpu.dot_dimension_numbers<[1], [0], [0], [1], [0, 0, 1, 1], [], []>} : vector<2x32xf32>, vector<32x256xf32>, vector<2x256xf32> -> vector<2x256xf32>
    %24 = arith.mulf %23, %0 : vector<2x256xf32>
    %25 = arith.truncf %24 : vector<2x256xf32> to vector<2x256xbf16>
    %c0_12 = arith.constant 0 : index
    %c1024 = arith.constant 1024 : index
    %26 = vector.load %arg8[%c0_12, %c1024] : memref<2x2048xbf16, #tpu.memory_space<vmem>>, vector<2x256xbf16>
    tpu.vector_store %arg8[%c0_12, %c1024], %25 {strides = array<i32>} : memref<2x2048xbf16, #tpu.memory_space<vmem>>, vector<2x256xbf16>,
    %27 = vector.extract_strided_slice %0 {offsets = [0, 160], sizes = [2, 32], strides = [1, 1]} : vector<2x256xf32> to vector<2x32xf32>
    %cst_13 = arith.constant dense<0.000000e+00> : vector<2x256xf32>
    %28 = tpu.matmul %27, %1, %cst_13 {dimension_numbers = #tpu.dot_dimension_numbers<[1], [0], [0], [1], [0, 0, 1, 1], [], []>} : vector<2x32xf32>, vector<32x256xf32>, vector<2x256xf32> -> vector<2x256xf32>
    %29 = arith.mulf %28, %0 : vector<2x256xf32>
    %30 = arith.truncf %29 : vector<2x256xf32> to vector<2x256xbf16>
    %c0_14 = arith.constant 0 : index
    %c1280 = arith.constant 1280 : index
    %31 = vector.load %arg8[%c0_14, %c1280] : memref<2x2048xbf16, #tpu.memory_space<vmem>>, vector<2x256xbf16>
    tpu.vector_store %arg8[%c0_14, %c1280], %30 {strides = array<i32>} : memref<2x2048xbf16, #tpu.memory_space<vmem>>, vector<2x256xbf16>,
    %32 = vector.extract_strided_slice %0 {offsets = [0, 192], sizes = [2, 32], strides = [1, 1]} : vector<2x256xf32> to vector<2x32xf32>
    %cst_15 = arith.constant dense<0.000000e+00> : vector<2x256xf32>
    %33 = tpu.matmul %32, %1, %cst_15 {dimension_numbers = #tpu.dot_dimension_numbers<[1], [0], [0], [1], [0, 0, 1, 1], [], []>} : vector<2x32xf32>, vector<32x256xf32>, vector<2x256xf32> -> vector<2x256xf32>
    %34 = arith.mulf %33, %0 : vector<2x256xf32>
    %35 = arith.truncf %34 : vector<2x256xf32> to vector<2x256xbf16>
    %c0_16 = arith.constant 0 : index
    %c1536 = arith.constant 1536 : index
    %36 = vector.load %arg8[%c0_16, %c1536] : memref<2x2048xbf16, #tpu.memory_space<vmem>>, vector<2x256xbf16>
    tpu.vector_store %arg8[%c0_16, %c1536], %35 {strides = array<i32>} : memref<2x2048xbf16, #tpu.memory_space<vmem>>, vector<2x256xbf16>,
    %37 = vector.extract_strided_slice %0 {offsets = [0, 224], sizes = [2, 32], strides = [1, 1]} : vector<2x256xf32> to vector<2x32xf32>
    %cst_17 = arith.constant dense<0.000000e+00> : vector<2x256xf32>
    %38 = tpu.matmul %37, %1, %cst_17 {dimension_numbers = #tpu.dot_dimension_numbers<[1], [0], [0], [1], [0, 0, 1, 1], [], []>} : vector<2x32xf32>, vector<32x256xf32>, vector<2x256xf32> -> vector<2x256xf32>
    %39 = arith.mulf %38, %0 : vector<2x256xf32>
    %40 = arith.truncf %39 : vector<2x256xf32> to vector<2x256xbf16>
    %c0_18 = arith.constant 0 : index
    %c1792 = arith.constant 1792 : index
    %41 = vector.load %arg8[%c0_18, %c1792] : memref<2x2048xbf16, #tpu.memory_space<vmem>>, vector<2x256xbf16>
    tpu.vector_store %arg8[%c0_18, %c1792], %40 {strides = array<i32>} : memref<2x2048xbf16, #tpu.memory_space<vmem>>, vector<2x256xbf16>,
    %c0_19 = arith.constant 0 : index
    %c0_20 = arith.constant 0 : index
    %42 = vector.load %arg8[%c0_19, %c0_20] : memref<2x2048xbf16, #tpu.memory_space<vmem>>, vector<2x2048xbf16>
    %c0_21 = arith.constant 0 : index
    %c0_22 = arith.constant 0 : index
    %43 = vector.load %arg3[%c0_21, %c0_22] : memref<2048x128xbf16, #tpu.memory_space<vmem>>, vector<2048x128xbf16>
    %cst_23 = arith.constant dense<0.000000e+00> : vector<2x128xf32>
    %44 = tpu.matmul %42, %43, %cst_23 {dimension_numbers = #tpu.dot_dimension_numbers<[1], [0], [0], [1], [0, 0, 1, 1], [], []>} : vector<2x2048xbf16>, vector<2048x128xbf16>, vector<2x128xf32> -> vector<2x128xf32>
    %c0_24 = arith.constant 0 : index
    %c0_25 = arith.constant 0 : index
    %45 = vector.load %arg6[%c0_24, %c0_25] : memref<2x128xf32, #tpu.memory_space<vmem>>, vector<2x128xf32>
    tpu.vector_store %arg6[%c0_24, %c0_25], %44 {strides = array<i32>} : memref<2x128xf32, #tpu.memory_space<vmem>>, vector<2x128xf32>,
    %46 = arith.truncf %0 : vector<2x256xf32> to vector<2x256xbf16>
    %c0_26 = arith.constant 0 : index
    %c0_27 = arith.constant 0 : index
    %47 = vector.load %arg4[%c0_26, %c0_27] : memref<256x128xbf16, #tpu.memory_space<vmem>>, vector<256x128xbf16>
    %cst_28 = arith.constant dense<0.000000e+00> : vector<2x128xf32>
    %48 = tpu.matmul %46, %47, %cst_28 {dimension_numbers = #tpu.dot_dimension_numbers<[1], [0], [0], [1], [0, 0, 1, 1], [], []>} : vector<2x256xbf16>, vector<256x128xbf16>, vector<2x128xf32> -> vector<2x128xf32>
    %c0_29 = arith.constant 0 : index
    %c0_30 = arith.constant 0 : index
    %49 = vector.load %arg5[%c0_29, %c0_30] : memref<1x128xf32, #tpu.memory_space<vmem>>, vector<1x128xf32>
    %50 = vector.broadcast %49 : vector<1x128xf32> to vector<2x128xf32>
    %51 = arith.addf %48, %50 : vector<2x128xf32>
    %cst_31 = arith.constant 0.000000e+00 : f32
    %52 = vector.broadcast %cst_31 : f32 to vector<2x128xf32>
    %53 = arith.maximumf %51, %52 : vector<2x128xf32>
    %c0_32 = arith.constant 0 : index
    %c0_33 = arith.constant 0 : index
    %54 = vector.load %arg7[%c0_32, %c0_33] : memref<2x128xf32, #tpu.memory_space<vmem>>, vector<2x128xf32>
    tpu.vector_store %arg7[%c0_32, %c0_33], %53 {strides = array<i32>} : memref<2x128xf32, #tpu.memory_space<vmem>>, vector<2x128xf32>,
    return
  }
  func.func @transform_0(%arg0: i32) -> (i32, i32) {
    %c0_i32 = arith.constant 0 : i32
    %c0_i32_0 = arith.constant 0 : i32
    return %arg0, %c0_i32 : i32, i32
  }
  func.func @transform_1(%arg0: i32) -> (i32, i32) {
    %c0_i32 = arith.constant 0 : i32
    %c0_i32_0 = arith.constant 0 : i32
    %c0_i32_1 = arith.constant 0 : i32
    return %c0_i32, %c0_i32_0 : i32, i32
  }
  func.func @transform_2(%arg0: i32) -> (i32, i32) {
    %c0_i32 = arith.constant 0 : i32
    %c0_i32_0 = arith.constant 0 : i32
    %c0_i32_1 = arith.constant 0 : i32
    return %c0_i32, %c0_i32_0 : i32, i32
  }
  func.func @transform_3(%arg0: i32) -> (i32, i32) {
    %c0_i32 = arith.constant 0 : i32
    %c0_i32_0 = arith.constant 0 : i32
    %c0_i32_1 = arith.constant 0 : i32
    return %c0_i32, %c0_i32_0 : i32, i32
  }
  func.func @transform_4(%arg0: i32) -> (i32, i32) {
    %c0_i32 = arith.constant 0 : i32
    %c0_i32_0 = arith.constant 0 : i32
    %c0_i32_1 = arith.constant 0 : i32
    return %c0_i32, %c0_i32_0 : i32, i32
  }
  func.func @transform_5(%arg0: i32) -> (i32, i32) {
    %c0_i32 = arith.constant 0 : i32
    %c0_i32_0 = arith.constant 0 : i32
    return %arg0, %c0_i32 : i32, i32
  }
  func.func @transform_6(%arg0: i32) -> (i32, i32) {
    %c0_i32 = arith.constant 0 : i32
    %c0_i32_0 = arith.constant 0 : i32
    return %arg0, %c0_i32 : i32, i32
  }
}

</mosaic_0001>

<llo_original>
// kernel: pair_selection_forward.1
$region0: #{pair_selection_forward.1}
  #allocation0 [shape = 'u32[]', space=smem, size = 0x4, offset = 0x4, fixed_abs, tag = 'smem constant byte address 0x4 - core index']
  #allocation1 [shape = 'u32[72,128]{1,0:T(1,128)}', space=vmem, size = 0x9000, scoped, tag = 'internal scratch']
  #allocation2 [shape = 'bf16[2,2048]{1,0:T(2,128)(2,1)}', space=vmem, size = 0x2000, scoped, tag = 'scratch operand']
  %s0 = inlined_call_operand.vmem [shape: f32[2,256], index: 0, kind: input, shape index: {}]
  %s1 = inlined_call_operand.vmem [shape: f32[32,256], index: 1, kind: input, shape index: {}]
  %s2 = inlined_call_operand.vmem [shape: bf16[2048,128], index: 2, kind: input, shape index: {}]
  %s3 = inlined_call_operand.vmem [shape: bf16[256,128], index: 3, kind: input, shape index: {}]
  %s4 = inlined_call_operand.vmem [shape: f32[1,128], index: 4, kind: input, shape index: {}]
  %s5 = inlined_call_operand.hbm [shape: f32[2,128], index: 5, kind: output, shape index: {0}]
  %s6 = inlined_call_operand.hbm [shape: f32[2,128], index: 6, kind: output, shape index: {1}]
  %7 = xla_tuple %s5, %s6
  %s8 = sld [smem:[#allocation0]]
  $region38: #{pair_selection_forward.1} parent=0
    _
  %s10 = ssub.s32 1, %s8
  %s11 = scalar_select 0, %s10, %s8
  $region1: #{pair_selection_forward.1} parent=0
    #allocation3 [shape = 'u8[1024]{0}', space=vmem, size = 0x400, scoped, tag = 'output window, operand 0, single buffered']
    #allocation4 [shape = 's32[1]{0}', space=sflag, size = 0x4, scoped, tag = 'scoped memory for pair_selection_forward.1']
    #allocation5 [shape = 'u8[1024]{0}', space=vmem, size = 0x400, scoped, tag = 'output window, operand 1, single buffered']
    #allocation6 [shape = 's32[1]{0}', space=sflag, size = 0x4, scoped, tag = 'scoped memory for pair_selection_forward.1']
    %12 = vsyncpa [#allocation4], 0
    %13 = vsyncpa [#allocation6], 0
    // Predicated region
    $region2: #{pair_selection_forward.1} parent=1 // pred_check
      _
    $region3: #{pair_selection_forward.1} parent=1 // pred_check_branch
      %15 = sbr.rel (0) target = $region5
    $region4: #{pair_selection_forward.1} parent=1 // pred_region
      _
    $region5: #{pair_selection_forward.1} parent=1 // pred_fallthru
      _
    // Predicated region
    $region6: #{pair_selection_forward.1} parent=1 // pred_check
      _
    $region7: #{pair_selection_forward.1} parent=1 // pred_check_branch
      %17 = sbr.rel (0) target = $region9
    $region8: #{pair_selection_forward.1} parent=1 // pred_region
      _
    $region9: #{pair_selection_forward.1} parent=1 // pred_fallthru
      _
    // Predicated region
    $region10: #{pair_selection_forward.1} parent=1 // pred_check
      _
    $region11: #{pair_selection_forward.1} parent=1 // pred_check_branch
      %19 = sbr.rel (0) target = $region13
    $region12: #{pair_selection_forward.1} parent=1 // pred_region
      _
    $region13: #{pair_selection_forward.1} parent=1 // pred_fallthru
      _
    // Predicated region
    $region14: #{pair_selection_forward.1} parent=1 // pred_check
      _
    $region15: #{pair_selection_forward.1} parent=1 // pred_check_branch
      %21 = sbr.rel (0) target = $region17
    $region16: #{pair_selection_forward.1} parent=1 // pred_region
      _
    $region17: #{pair_selection_forward.1} parent=1 // pred_fallthru
      _
    // Predicated region
    $region18: #{pair_selection_forward.1} parent=1 // pred_check
      _
    $region19: #{pair_selection_forward.1} parent=1 // pred_check_branch
      %23 = sbr.rel (0) target = $region21
    $region20: #{pair_selection_forward.1} parent=1 // pred_region
      _
    $region21: #{pair_selection_forward.1} parent=1 // pred_fallthru
      _
    %v24 = vld [vmem:[%s0] sm:$0xf]
    %v25 = vld [vmem:[%s1] sm:$0xff]
    %v26 = vld [vmem:[%s1 + $0x8] sm:$0xff]
    %v27 = vld [vmem:[%s1 + $0x10] sm:$0xff]
    %v28 = vld [vmem:[%s1 + $0x18] sm:$0xff]
    %v29 = vld [vmem:[%s1 + $0x20] sm:$0xff]
    %v30 = vld [vmem:[%s1 + $0x28] sm:$0xff]
    %v31 = vld [vmem:[%s1 + $0x30] sm:$0xff]
    %v32 = vld [vmem:[%s1 + $0x38] sm:$0xff]
    %vm33 = vcmask 261120
    %v35 = vsel %vm33, %v24, 0
    %37 = vmatpush.msra.mxu0 0.0
    %38 = vmatpush.msra.mxu0 0.0
    %39 = vmatpush.msra.mxu0 0.0
    %40 = vmatpush.msra.mxu0 0.0
    %41 = vmatpush.msra.mxu0 0.0
    %42 = vmatpush.msra.mxu0 0.0
    %43 = vmatpush.msra.mxu0 0.0
    %44 = vmatpush.msra.mxu0 0.0
    %45 = vmatpush.msra.mxu0 0.0
    %46 = vmatpush.msra.mxu0 0.0
    %47 = vmatpush.msra.mxu0 0.0
    %48 = vmatpush.msra.mxu0 0.0
    %49 = vmatpush.msra.mxu0 %v31
    %50 = vmatpush.msra.mxu0 %v29
    %51 = vmatpush.msra.mxu0 %v27
    %52 = vmatpush.msra.mxu0 %v25
    %53 = vmatmul.f32.gmra.mxu0 %v35
    %v54 = vpop.f32.mrf.mxu0
    %v55 = vadd.f32 0.0, %v54
    %56 = vdwg.mxu0
    %57 = vmatpush.msra.mxu0 0.0
    %58 = vmatpush.msra.mxu0 0.0
    %59 = vmatpush.msra.mxu0 0.0
    %60 = vmatpush.msra.mxu0 0.0
    %61 = vmatpush.msra.mxu0 0.0
    %62 = vmatpush.msra.mxu0 0.0
    %63 = vmatpush.msra.mxu0 0.0
    %64 = vmatpush.msra.mxu0 0.0
    %65 = vmatpush.msra.mxu0 0.0
    %66 = vmatpush.msra.mxu0 0.0
    %67 = vmatpush.msra.mxu0 0.0
    %68 = vmatpush.msra.mxu0 0.0
    %69 = vmatpush.msra.mxu0 %v32
    %70 = vmatpush.msra.mxu0 %v30
    %71 = vmatpush.msra.mxu0 %v28
    %72 = vmatpush.msra.mxu0 %v26
    %73 = vmatmul.f32.gmra.mxu0 %v35
    %v74 = vpop.f32.mrf.mxu0
    %v75 = vadd.f32 0.0, %v74
    %76 = vdwg.mxu0
    %77 = vst [vmem:[#allocation1] ss:$4 sm:$0xff] %v24
    %v78 = vld.sshfl [vmem:[#allocation1] sm:$0xff pattern:$0x73625140]
    %v79 = vld.sshfl [vmem:[#allocation1 + $0x8] sm:$0xff pattern:$0x73625140]
    %v82 = vmul.f32 %v55, %v78
    %v83 = vmul.f32 %v75, %v79
    %v84 = vpack.c.bf16 %v83, %v82
    %v86 = vrot.slane %v84, 3
    %vm87 = vcmask 1040384
    %v90 = vsel %vm87, %v84, %v86
    %92 = vst [vmem:[#allocation2] sm:$0x3] %v90
    %93 = vst [vmem:[#allocation1] ss:$4 sm:$0xff] %v24
    %v94 = vld.sshfl [vmem:[#allocation1] sm:$0xff pattern:$0x73625140]
    %95 = vrot.lane.b32.xlu0 %v94, 96
    %v96 = vpop.permute.xlu0 %95
    %v97 = vsel %vm33, %v96, 0
    %99 = vmatpush.msra.mxu0 0.0
    %100 = vmatpush.msra.mxu0 0.0
    %101 = vmatpush.msra.mxu0 0.0
    %102 = vmatpush.msra.mxu0 0.0
    %103 = vmatpush.msra.mxu0 0.0
    %104 = vmatpush.msra.mxu0 0.0
    %105 = vmatpush.msra.mxu0 0.0
    %106 = vmatpush.msra.mxu0 0.0
    %107 = vmatpush.msra.mxu0 0.0
    %108 = vmatpush.msra.mxu0 0.0
    %109 = vmatpush.msra.mxu0 0.0
    %110 = vmatpush.msra.mxu0 0.0
    %111 = vmatpush.msra.mxu0 %v31
    %112 = vmatpush.msra.mxu0 %v29
    %113 = vmatpush.msra.mxu0 %v27
    %114 = vmatpush.msra.mxu0 %v25
    %115 = vmatmul.f32.gmra.mxu0 %v97
    %v116 = vpop.f32.mrf.mxu0
    %v117 = vadd.f32 0.0, %v116
    %118 = vdwg.mxu0
    %119 = vmatpush.msra.mxu0 0.0
    %120 = vmatpush.msra.mxu0 0.0
    %121 = vmatpush.msra.mxu0 0.0
    %122 = vmatpush.msra.mxu0 0.0
    %123 = vmatpush.msra.mxu0 0.0
    %124 = vmatpush.msra.mxu0 0.0
    %125 = vmatpush.msra.mxu0 0.0
    %126 = vmatpush.msra.mxu0 0.0
    %127 = vmatpush.msra.mxu0 0.0
    %128 = vmatpush.msra.mxu0 0.0
    %129 = vmatpush.msra.mxu0 0.0
    %130 = vmatpush.msra.mxu0 0.0
    %131 = vmatpush.msra.mxu0 %v32
    %132 = vmatpush.msra.mxu0 %v30
    %133 = vmatpush.msra.mxu0 %v28
    %134 = vmatpush.msra.mxu0 %v26
    %135 = vmatmul.f32.gmra.mxu0 %v97
    %v136 = vpop.f32.mrf.mxu0
    %v137 = vadd.f32 0.0, %v136
    %138 = vdwg.mxu0
    %139 = vst [vmem:[#allocation1] ss:$4 sm:$0xff] %v24
    %v140 = vld.sshfl [vmem:[#allocation1] sm:$0xff pattern:$0x73625140]
    %v141 = vld.sshfl [vmem:[#allocation1 + $0x8] sm:$0xff pattern:$0x73625140]
    %v144 = vmul.f32 %v117, %v140
    %v145 = vmul.f32 %v137, %v141
    %v146 = vpack.c.bf16 %v145, %v144
    %v148 = vrot.slane %v146, 3
    %v151 = vsel %vm87, %v146, %v148
    %153 = vst [vmem:[#allocation2 + $0x2] sm:$0x3] %v151
    %154 = vst [vmem:[#allocation1] ss:$4 sm:$0xff] %v24
    %v155 = vld.sshfl [vmem:[#allocation1] sm:$0xff pattern:$0x73625140]
    %156 = vrot.lane.b32.xlu0 %v155, 64
    %v157 = vpop.permute.xlu0 %156
    %v158 = vsel %vm33, %v157, 0
    %160 = vmatpush.msra.mxu0 0.0
    %161 = vmatpush.msra.mxu0 0.0
    %162 = vmatpush.msra.mxu0 0.0
    %163 = vmatpush.msra.mxu0 0.0
    %164 = vmatpush.msra.mxu0 0.0
    %165 = vmatpush.msra.mxu0 0.0
    %166 = vmatpush.msra.mxu0 0.0
    %167 = vmatpush.msra.mxu0 0.0
    %168 = vmatpush.msra.mxu0 0.0
    %169 = vmatpush.msra.mxu0 0.0
    %170 = vmatpush.msra.mxu0 0.0
    %171 = vmatpush.msra.mxu0 0.0
    %172 = vmatpush.msra.mxu0 %v31
    %173 = vmatpush.msra.mxu0 %v29
    %174 = vmatpush.msra.mxu0 %v27
    %175 = vmatpush.msra.mxu0 %v25
    %176 = vmatmul.f32.gmra.mxu0 %v158
    %v177 = vpop.f32.mrf.mxu0
    %v178 = vadd.f32 0.0, %v177
    %179 = vdwg.mxu0
    %180 = vmatpush.msra.mxu0 0.0
    %181 = vmatpush.msra.mxu0 0.0
    %182 = vmatpush.msra.mxu0 0.0
    %183 = vmatpush.msra.mxu0 0.0
    %184 = vmatpush.msra.mxu0 0.0
    %185 = vmatpush.msra.mxu0 0.0
    %186 = vmatpush.msra.mxu0 0.0
    %187 = vmatpush.msra.mxu0 0.0
    %188 = vmatpush.msra.mxu0 0.0
    %189 = vmatpush.msra.mxu0 0.0
    %190 = vmatpush.msra.mxu0 0.0
    %191 = vmatpush.msra.mxu0 0.0
    %192 = vmatpush.msra.mxu0 %v32
    %193 = vmatpush.msra.mxu0 %v30
    %194 = vmatpush.msra.mxu0 %v28
    %195 = vmatpush.msra.mxu0 %v26
    %196 = vmatmul.f32.gmra.mxu0 %v158
    %v197 = vpop.f32.mrf.mxu0
    %v198 = vadd.f32 0.0, %v197
    %199 = vdwg.mxu0
    %200 = vst [vmem:[#allocation1] ss:$4 sm:$0xff] %v24
    %v201 = vld.sshfl [vmem:[#allocation1] sm:$0xff pattern:$0x73625140]
    %v202 = vld.sshfl [vmem:[#allocation1 + $0x8] sm:$0xff pattern:$0x73625140]
    %v205 = vmul.f32 %v178, %v201
    %v206 = vmul.f32 %v198, %v202
    %v207 = vpack.c.bf16 %v206, %v205
    %v209 = vrot.slane %v207, 3
    %v212 = vsel %vm87, %v207, %v209
    %214 = vst [vmem:[#allocation2 + $0x4] sm:$0x3] %v212
    %215 = vst [vmem:[#allocation1] ss:$4 sm:$0xff] %v24
    %v216 = vld.sshfl [vmem:[#allocation1] sm:$0xff pattern:$0x73625140]
    %217 = vrot.lane.b32.xlu0 %v216, 32
    %v218 = vpop.permute.xlu0 %217
    %v219 = vsel %vm33, %v218, 0
    %221 = vmatpush.msra.mxu0 0.0
    %222 = vmatpush.msra.mxu0 0.0
    %223 = vmatpush.msra.mxu0 0.0
    %224 = vmatpush.msra.mxu0 0.0
    %225 = vmatpush.msra.mxu0 0.0
    %226 = vmatpush.msra.mxu0 0.0
    %227 = vmatpush.msra.mxu0 0.0
    %228 = vmatpush.msra.mxu0 0.0
    %229 = vmatpush.msra.mxu0 0.0
    %230 = vmatpush.msra.mxu0 0.0
    %231 = vmatpush.msra.mxu0 0.0
    %232 = vmatpush.msra.mxu0 0.0
    %233 = vmatpush.msra.mxu0 %v31
    %234 = vmatpush.msra.mxu0 %v29
    %235 = vmatpush.msra.mxu0 %v27
    %236 = vmatpush.msra.mxu0 %v25
    %237 = vmatmul.f32.gmra.mxu0 %v219
    %v238 = vpop.f32.mrf.mxu0
    %v239 = vadd.f32 0.0, %v238
    %240 = vdwg.mxu0
    %241 = vmatpush.msra.mxu0 0.0
    %242 = vmatpush.msra.mxu0 0.0
    %243 = vmatpush.msra.mxu0 0.0
    %244 = vmatpush.msra.mxu0 0.0
    %245 = vmatpush.msra.mxu0 0.0
    %246 = vmatpush.msra.mxu0 0.0
    %247 = vmatpush.msra.mxu0 0.0
    %248 = vmatpush.msra.mxu0 0.0
    %249 = vmatpush.msra.mxu0 0.0
    %250 = vmatpush.msra.mxu0 0.0
    %251 = vmatpush.msra.mxu0 0.0
    %252 = vmatpush.msra.mxu0 0.0
    %253 = vmatpush.msra.mxu0 %v32
    %254 = vmatpush.msra.mxu0 %v30
    %255 = vmatpush.msra.mxu0 %v28
    %256 = vmatpush.msra.mxu0 %v26
    %257 = vmatmul.f32.gmra.mxu0 %v219
    %v258 = vpop.f32.mrf.mxu0
    %v259 = vadd.f32 0.0, %v258
    %260 = vdwg.mxu0
    %261 = vst [vmem:[#allocation1] ss:$4 sm:$0xff] %v24
    %v262 = vld.sshfl [vmem:[#allocation1] sm:$0xff pattern:$0x73625140]
    %v263 = vld.sshfl [vmem:[#allocation1 + $0x8] sm:$0xff pattern:$0x73625140]
    %v266 = vmul.f32 %v239, %v262
    %v267 = vmul.f32 %v259, %v263
    %v268 = vpack.c.bf16 %v267, %v266
    %v270 = vrot.slane %v268, 3
    %v273 = vsel %vm87, %v268, %v270
    %275 = vst [vmem:[#allocation2 + $0x6] sm:$0x3] %v273
    %276 = vst [vmem:[#allocation1] ss:$4 sm:$0xff] %v24
    %v277 = vld.sshfl [vmem:[#allocation1 + $0x8] sm:$0xff pattern:$0x73625140]
    %v278 = vsel %vm33, %v277, 0
    %280 = vmatpush.msra.mxu0 0.0
    %281 = vmatpush.msra.mxu0 0.0
    %282 = vmatpush.msra.mxu0 0.0
    %283 = vmatpush.msra.mxu0 0.0
    %284 = vmatpush.msra.mxu0 0.0
    %285 = vmatpush.msra.mxu0 0.0
    %286 = vmatpush.msra.mxu0 0.0
    %287 = vmatpush.msra.mxu0 0.0
    %288 = vmatpush.msra.mxu0 0.0
    %289 = vmatpush.msra.mxu0 0.0
    %290 = vmatpush.msra.mxu0 0.0
    %291 = vmatpush.msra.mxu0 0.0
    %292 = vmatpush.msra.mxu0 %v31
    %293 = vmatpush.msra.mxu0 %v29
    %294 = vmatpush.msra.mxu0 %v27
    %295 = vmatpush.msra.mxu0 %v25
    %296 = vmatmul.f32.gmra.mxu0 %v278
    %v297 = vpop.f32.mrf.mxu0
    %v298 = vadd.f32 0.0, %v297
    %299 = vdwg.mxu0
    %300 = vmatpush.msra.mxu0 0.0
    %301 = vmatpush.msra.mxu0 0.0
    %302 = vmatpush.msra.mxu0 0.0
    %303 = vmatpush.msra.mxu0 0.0
    %304 = vmatpush.msra.mxu0 0.0
    %305 = vmatpush.msra.mxu0 0.0
    %306 = vmatpush.msra.mxu0 0.0
    %307 = vmatpush.msra.mxu0 0.0
    %308 = vmatpush.msra.mxu0 0.0
    %309 = vmatpush.msra.mxu0 0.0
    %310 = vmatpush.msra.mxu0 0.0
    %311 = vmatpush.msra.mxu0 0.0
    %312 = vmatpush.msra.mxu0 %v32
    %313 = vmatpush.msra.mxu0 %v30
    %314 = vmatpush.msra.mxu0 %v28
    %315 = vmatpush.msra.mxu0 %v26
    %316 = vmatmul.f32.gmra.mxu0 %v278
    %v317 = vpop.f32.mrf.mxu0
    %v318 = vadd.f32 0.0, %v317
    %319 = vdwg.mxu0
    %320 = vst [vmem:[#allocation1] ss:$4 sm:$0xff] %v24
    %v321 = vld.sshfl [vmem:[#allocation1] sm:$0xff pattern:$0x73625140]
    %v322 = vld.sshfl [vmem:[#allocation1 + $0x8] sm:$0xff pattern:$0x73625140]
    %v325 = vmul.f32 %v298, %v321
    %v326 = vmul.f32 %v318, %v322
    %v327 = vpack.c.bf16 %v326, %v325
    %v329 = vrot.slane %v327, 3
    %v332 = vsel %vm87, %v327, %v329
    %334 = vst [vmem:[#allocation2 + $0x8] sm:$0x3] %v332
    %335 = vst [vmem:[#allocation1] ss:$4 sm:$0xff] %v24
    %v336 = vld.sshfl [vmem:[#allocation1 + $0x8] sm:$0xff pattern:$0x73625140]
    %337 = vrot.lane.b32.xlu0 %v336, 96
    %v338 = vpop.permute.xlu0 %337
    %v339 = vsel %vm33, %v338, 0
    %341 = vmatpush.msra.mxu0 0.0
    %342 = vmatpush.msra.mxu0 0.0
    %343 = vmatpush.msra.mxu0 0.0
    %344 = vmatpush.msra.mxu0 0.0
    %345 = vmatpush.msra.mxu0 0.0
    %346 = vmatpush.msra.mxu0 0.0
    %347 = vmatpush.msra.mxu0 0.0
    %348 = vmatpush.msra.mxu0 0.0
    %349 = vmatpush.msra.mxu0 0.0
    %350 = vmatpush.msra.mxu0 0.0
    %351 = vmatpush.msra.mxu0 0.0
    %352 = vmatpush.msra.mxu0 0.0
    %353 = vmatpush.msra.mxu0 %v31
    %354 = vmatpush.msra.mxu0 %v29
    %355 = vmatpush.msra.mxu0 %v27
    %356 = vmatpush.msra.mxu0 %v25
    %357 = vmatmul.f32.gmra.mxu0 %v339
    %v358 = vpop.f32.mrf.mxu0
    %v359 = vadd.f32 0.0, %v358
    %360 = vdwg.mxu0
    %361 = vmatpush.msra.mxu0 0.0
    %362 = vmatpush.msra.mxu0 0.0
    %363 = vmatpush.msra.mxu0 0.0
    %364 = vmatpush.msra.mxu0 0.0
    %365 = vmatpush.msra.mxu0 0.0
    %366 = vmatpush.msra.mxu0 0.0
    %367 = vmatpush.msra.mxu0 0.0
    %368 = vmatpush.msra.mxu0 0.0
    %369 = vmatpush.msra.mxu0 0.0
    %370 = vmatpush.msra.mxu0 0.0
    %371 = vmatpush.msra.mxu0 0.0
    %372 = vmatpush.msra.mxu0 0.0
    %373 = vmatpush.msra.mxu0 %v32
    %374 = vmatpush.msra.mxu0 %v30
    %375 = vmatpush.msra.mxu0 %v28
    %376 = vmatpush.msra.mxu0 %v26
    %377 = vmatmul.f32.gmra.mxu0 %v339
    %v378 = vpop.f32.mrf.mxu0
    %v379 = vadd.f32 0.0, %v378
    %380 = vdwg.mxu0
    %381 = vst [vmem:[#allocation1] ss:$4 sm:$0xff] %v24
    %v382 = vld.sshfl [vmem:[#allocation1] sm:$0xff pattern:$0x73625140]
    %v383 = vld.sshfl [vmem:[#allocation1 + $0x8] sm:$0xff pattern:$0x73625140]
    %v386 = vmul.f32 %v359, %v382
    %v387 = vmul.f32 %v379, %v383
    %v388 = vpack.c.bf16 %v387, %v386
    %v390 = vrot.slane %v388, 3
    %v393 = vsel %vm87, %v388, %v390
    %395 = vst [vmem:[#allocation2 + $0xa] sm:$0x3] %v393
    %396 = vst [vmem:[#allocation1] ss:$4 sm:$0xff] %v24
    %v397 = vld.sshfl [vmem:[#allocation1 + $0x8] sm:$0xff pattern:$0x73625140]
    %398 = vrot.lane.b32.xlu0 %v397, 64
    %v399 = vpop.permute.xlu0 %398
    %v400 = vsel %vm33, %v399, 0
    %402 = vmatpush.msra.mxu0 0.0
    %403 = vmatpush.msra.mxu0 0.0
    %404 = vmatpush.msra.mxu0 0.0
    %405 = vmatpush.msra.mxu0 0.0
    %406 = vmatpush.msra.mxu0 0.0
    %407 = vmatpush.msra.mxu0 0.0
    %408 = vmatpush.msra.mxu0 0.0
    %409 = vmatpush.msra.mxu0 0.0
    %410 = vmatpush.msra.mxu0 0.0
    %411 = vmatpush.msra.mxu0 0.0
    %412 = vmatpush.msra.mxu0 0.0
    %413 = vmatpush.msra.mxu0 0.0
    %414 = vmatpush.msra.mxu0 %v31
    %415 = vmatpush.msra.mxu0 %v29
    %416 = vmatpush.msra.mxu0 %v27
    %417 = vmatpush.msra.mxu0 %v25
    %418 = vmatmul.f32.gmra.mxu0 %v400
    %v419 = vpop.f32.mrf.mxu0
    %v420 = vadd.f32 0.0, %v419
    %421 = vdwg.mxu0
    %422 = vmatpush.msra.mxu0 0.0
    %423 = vmatpush.msra.mxu0 0.0
    %424 = vmatpush.msra.mxu0 0.0
    %425 = vmatpush.msra.mxu0 0.0
    %426 = vmatpush.msra.mxu0 0.0
    %427 = vmatpush.msra.mxu0 0.0
    %428 = vmatpush.msra.mxu0 0.0
    %429 = vmatpush.msra.mxu0 0.0
    %430 = vmatpush.msra.mxu0 0.0
    %431 = vmatpush.msra.mxu0 0.0
    %432 = vmatpush.msra.mxu0 0.0
    %433 = vmatpush.msra.mxu0 0.0
    %434 = vmatpush.msra.mxu0 %v32
    %435 = vmatpush.msra.mxu0 %v30
    %436 = vmatpush.msra.mxu0 %v28
    %437 = vmatpush.msra.mxu0 %v26
    %438 = vmatmul.f32.gmra.mxu0 %v400
    %v439 = vpop.f32.mrf.mxu0
    %v440 = vadd.f32 0.0, %v439
    %441 = vdwg.mxu0
    %442 = vst [vmem:[#allocation1] ss:$4 sm:$0xff] %v24
    %v443 = vld.sshfl [vmem:[#allocation1] sm:$0xff pattern:$0x73625140]
    %v444 = vld.sshfl [vmem:[#allocation1 + $0x8] sm:$0xff pattern:$0x73625140]
    %v447 = vmul.f32 %v420, %v443
    %v448 = vmul.f32 %v440, %v444
    %v449 = vpack.c.bf16 %v448, %v447
    %v451 = vrot.slane %v449, 3
    %v454 = vsel %vm87, %v449, %v451
    %456 = vst [vmem:[#allocation2 + $0xc] sm:$0x3] %v454
    %457 = vst [vmem:[#allocation1] ss:$4 sm:$0xff] %v24
    %v458 = vld.sshfl [vmem:[#allocation1 + $0x8] sm:$0xff pattern:$0x73625140]
    %459 = vrot.lane.b32.xlu0 %v458, 32
    %v460 = vpop.permute.xlu0 %459
    %v461 = vsel %vm33, %v460, 0
    %463 = vmatpush.msra.mxu0 0.0
    %464 = vmatpush.msra.mxu0 0.0
    %465 = vmatpush.msra.mxu0 0.0
    %466 = vmatpush.msra.mxu0 0.0
    %467 = vmatpush.msra.mxu0 0.0
    %468 = vmatpush.msra.mxu0 0.0
    %469 = vmatpush.msra.mxu0 0.0
    %470 = vmatpush.msra.mxu0 0.0
    %471 = vmatpush.msra.mxu0 0.0
    %472 = vmatpush.msra.mxu0 0.0
    %473 = vmatpush.msra.mxu0 0.0
    %474 = vmatpush.msra.mxu0 0.0
    %475 = vmatpush.msra.mxu0 %v31
    %476 = vmatpush.msra.mxu0 %v29
    %477 = vmatpush.msra.mxu0 %v27
    %478 = vmatpush.msra.mxu0 %v25
    %479 = vmatmul.f32.gmra.mxu0 %v461
    %v480 = vpop.f32.mrf.mxu0
    %v481 = vadd.f32 0.0, %v480
    %482 = vdwg.mxu0
    %483 = vmatpush.msra.mxu0 0.0
    %484 = vmatpush.msra.mxu0 0.0
    %485 = vmatpush.msra.mxu0 0.0
    %486 = vmatpush.msra.mxu0 0.0
    %487 = vmatpush.msra.mxu0 0.0
    %488 = vmatpush.msra.mxu0 0.0
    %489 = vmatpush.msra.mxu0 0.0
    %490 = vmatpush.msra.mxu0 0.0
    %491 = vmatpush.msra.mxu0 0.0
    %492 = vmatpush.msra.mxu0 0.0
    %493 = vmatpush.msra.mxu0 0.0
    %494 = vmatpush.msra.mxu0 0.0
    %495 = vmatpush.msra.mxu0 %v32
    %496 = vmatpush.msra.mxu0 %v30
    %497 = vmatpush.msra.mxu0 %v28
    %498 = vmatpush.msra.mxu0 %v26
    %499 = vmatmul.f32.gmra.mxu0 %v461
    %v500 = vpop.f32.mrf.mxu0
    %v501 = vadd.f32 0.0, %v500
    %502 = vdwg.mxu0
    %503 = vst [vmem:[#allocation1] ss:$4 sm:$0xff] %v24
    %v504 = vld.sshfl [vmem:[#allocation1] sm:$0xff pattern:$0x73625140]
    %v505 = vld.sshfl [vmem:[#allocation1 + $0x8] sm:$0xff pattern:$0x73625140]
    %v508 = vmul.f32 %v481, %v504
    %v509 = vmul.f32 %v501, %v505
    %v510 = vpack.c.bf16 %v509, %v508
    %v512 = vrot.slane %v510, 3
    %v515 = vsel %vm87, %v510, %v512
    %517 = vst [vmem:[#allocation2 + $0xe] sm:$0x3] %v515
    %v518 = vld [vmem:[#allocation2] sm:$0xff]
    %v519 = vld [vmem:[#allocation2 + $0x8] sm:$0xff]
    %v520 = vld [vmem:[%s2] sm:$0xf]
    %v521 = vld [vmem:[%s2 + $0x4] sm:$0xf]
    %v522 = vld [vmem:[%s2 + $0x8] sm:$0xf]
    %v523 = vld [vmem:[%s2 + $0xc] sm:$0xf]
    %v524 = vld [vmem:[%s2 + $0x10] sm:$0xf]
    %v525 = vld [vmem:[%s2 + $0x14] sm:$0xf]
    %v526 = vld [vmem:[%s2 + $0x18] sm:$0xf]
    %v527 = vld [vmem:[%s2 + $0x1c] sm:$0xf]
    %v528 = vld [vmem:[%s2 + $0x20] sm:$0xf]
    %v529 = vld [vmem:[%s2 + $0x24] sm:$0xf]
    %v530 = vld [vmem:[%s2 + $0x28] sm:$0xf]
    %v531 = vld [vmem:[%s2 + $0x2c] sm:$0xf]
    %v532 = vld [vmem:[%s2 + $0x30] sm:$0xf]
    %v533 = vld [vmem:[%s2 + $0x34] sm:$0xf]
    %v534 = vld [vmem:[%s2 + $0x38] sm:$0xf]
    %v535 = vld [vmem:[%s2 + $0x3c] sm:$0xf]
    %v536 = vld [vmem:[%s2 + $0x40] sm:$0xf]
    %v537 = vld [vmem:[%s2 + $0x44] sm:$0xf]
    %v538 = vld [vmem:[%s2 + $0x48] sm:$0xf]
    %v539 = vld [vmem:[%s2 + $0x4c] sm:$0xf]
    %v540 = vld [vmem:[%s2 + $0x50] sm:$0xf]
    %v541 = vld [vmem:[%s2 + $0x54] sm:$0xf]
    %v542 = vld [vmem:[%s2 + $0x58] sm:$0xf]
    %v543 = vld [vmem:[%s2 + $0x5c] sm:$0xf]
    %v544 = vld [vmem:[%s2 + $0x60] sm:$0xf]
    %v545 = vld [vmem:[%s2 + $0x64] sm:$0xf]
    %v546 = vld [vmem:[%s2 + $0x68] sm:$0xf]
    %v547 = vld [vmem:[%s2 + $0x6c] sm:$0xf]
    %v548 = vld [vmem:[%s2 + $0x70] sm:$0xf]
    %v549 = vld [vmem:[%s2 + $0x74] sm:$0xf]
    %v550 = vld [vmem:[%s2 + $0x78] sm:$0xf]
    %v551 = vld [vmem:[%s2 + $0x7c] sm:$0xf]
    %v552 = vld [vmem:[%s2 + $0x80] sm:$0xf]
    %v553 = vld [vmem:[%s2 + $0x84] sm:$0xf]
    %v554 = vld [vmem:[%s2 + $0x88] sm:$0xf]
    %v555 = vld [vmem:[%s2 + $0x8c] sm:$0xf]
    %v556 = vld [vmem:[%s2 + $0x90] sm:$0xf]
    %v557 = vld [vmem:[%s2 + $0x94] sm:$0xf]
    %v558 = vld [vmem:[%s2 + $0x98] sm:$0xf]
    %v559 = vld [vmem:[%s2 + $0x9c] sm:$0xf]
    %v560 = vld [vmem:[%s2 + $0xa0] sm:$0xf]
    %v561 = vld [vmem:[%s2 + $0xa4] sm:$0xf]
    %v562 = vld [vmem:[%s2 + $0xa8] sm:$0xf]
    %v563 = vld [vmem:[%s2 + $0xac] sm:$0xf]
    %v564 = vld [vmem:[%s2 + $0xb0] sm:$0xf]
    %v565 = vld [vmem:[%s2 + $0xb4] sm:$0xf]
    %v566 = vld [vmem:[%s2 + $0xb8] sm:$0xf]
    %v567 = vld [vmem:[%s2 + $0xbc] sm:$0xf]
    %v568 = vld [vmem:[%s2 + $0xc0] sm:$0xf]
    %v569 = vld [vmem:[%s2 + $0xc4] sm:$0xf]
    %v570 = vld [vmem:[%s2 + $0xc8] sm:$0xf]
    %v571 = vld [vmem:[%s2 + $0xcc] sm:$0xf]
    %v572 = vld [vmem:[%s2 + $0xd0] sm:$0xf]
    %v573 = vld [vmem:[%s2 + $0xd4] sm:$0xf]
    %v574 = vld [vmem:[%s2 + $0xd8] sm:$0xf]
    %v575 = vld [vmem:[%s2 + $0xdc] sm:$0xf]
    %v576 = vld [vmem:[%s2 + $0xe0] sm:$0xf]
    %v577 = vld [vmem:[%s2 + $0xe4] sm:$0xf]
    %v578 = vld [vmem:[%s2 + $0xe8] sm:$0xf]
    %v579 = vld [vmem:[%s2 + $0xec] sm:$0xf]
    %v580 = vld [vmem:[%s2 + $0xf0] sm:$0xf]
    %v581 = vld [vmem:[%s2 + $0xf4] sm:$0xf]
    %v582 = vld [vmem:[%s2 + $0xf8] sm:$0xf]
    %v583 = vld [vmem:[%s2 + $0xfc] sm:$0xf]
    %v584 = vld [vmem:[%s2 + $0x100] sm:$0xf]
    %v585 = vld [vmem:[%s2 + $0x104] sm:$0xf]
    %v586 = vld [vmem:[%s2 + $0x108] sm:$0xf]
    %v587 = vld [vmem:[%s2 + $0x10c] sm:$0xf]
    %v588 = vld [vmem:[%s2 + $0x110] sm:$0xf]
    %v589 = vld [vmem:[%s2 + $0x114] sm:$0xf]
    %v590 = vld [vmem:[%s2 + $0x118] sm:$0xf]
    %v591 = vld [vmem:[%s2 + $0x11c] sm:$0xf]
    %v592 = vld [vmem:[%s2 + $0x120] sm:$0xf]
    %v593 = vld [vmem:[%s2 + $0x124] sm:$0xf]
    %v594 = vld [vmem:[%s2 + $0x128] sm:$0xf]
    %v595 = vld [vmem:[%s2 + $0x12c] sm:$0xf]
    %v596 = vld [vmem:[%s2 + $0x130] sm:$0xf]
    %v597 = vld [vmem:[%s2 + $0x134] sm:$0xf]
    %v598 = vld [vmem:[%s2 + $0x138] sm:$0xf]
    %v599 = vld [vmem:[%s2 + $0x13c] sm:$0xf]
    %v600 = vld [vmem:[%s2 + $0x140] sm:$0xf]
    %v601 = vld [vmem:[%s2 + $0x144] sm:$0xf]
    %v602 = vld [vmem:[%s2 + $0x148] sm:$0xf]
    %v603 = vld [vmem:[%s2 + $0x14c] sm:$0xf]
    %v604 = vld [vmem:[%s2 + $0x150] sm:$0xf]
    %v605 = vld [vmem:[%s2 + $0x154] sm:$0xf]
    %v606 = vld [vmem:[%s2 + $0x158] sm:$0xf]
    %v607 = vld [vmem:[%s2 + $0x15c] sm:$0xf]
    %v608 = vld [vmem:[%s2 + $0x160] sm:$0xf]
    %v609 = vld [vmem:[%s2 + $0x164] sm:$0xf]
    %v610 = vld [vmem:[%s2 + $0x168] sm:$0xf]
    %v611 = vld [vmem:[%s2 + $0x16c] sm:$0xf]
    %v612 = vld [vmem:[%s2 + $0x170] sm:$0xf]
    %v613 = vld [vmem:[%s2 + $0x174] sm:$0xf]
    %v614 = vld [vmem:[%s2 + $0x178] sm:$0xf]
    %v615 = vld [vmem:[%s2 + $0x17c] sm:$0xf]
    %v616 = vld [vmem:[%s2 + $0x180] sm:$0xf]
    %v617 = vld [vmem:[%s2 + $0x184] sm:$0xf]
    %v618 = vld [vmem:[%s2 + $0x188] sm:$0xf]
    %v619 = vld [vmem:[%s2 + $0x18c] sm:$0xf]
    %v620 = vld [vmem:[%s2 + $0x190] sm:$0xf]
    %v621 = vld [vmem:[%s2 + $0x194] sm:$0xf]
    %v622 = vld [vmem:[%s2 + $0x198] sm:$0xf]
    %v623 = vld [vmem:[%s2 + $0x19c] sm:$0xf]
    %v624 = vld [vmem:[%s2 + $0x1a0] sm:$0xf]
    %v625 = vld [vmem:[%s2 + $0x1a4] sm:$0xf]
    %v626 = vld [vmem:[%s2 + $0x1a8] sm:$0xf]
    %v627 = vld [vmem:[%s2 + $0x1ac] sm:$0xf]
    %v628 = vld [vmem:[%s2 + $0x1b0] sm:$0xf]
    %v629 = vld [vmem:[%s2 + $0x1b4] sm:$0xf]
    %v630 = vld [vmem:[%s2 + $0x1b8] sm:$0xf]
    %v631 = vld [vmem:[%s2 + $0x1bc] sm:$0xf]
    %v632 = vld [vmem:[%s2 + $0x1c0] sm:$0xf]
    %v633 = vld [vmem:[%s2 + $0x1c4] sm:$0xf]
    %v634 = vld [vmem:[%s2 + $0x1c8] sm:$0xf]
    %v635 = vld [vmem:[%s2 + $0x1cc] sm:$0xf]
    %v636 = vld [vmem:[%s2 + $0x1d0] sm:$0xf]
    %v637 = vld [vmem:[%s2 + $0x1d4] sm:$0xf]
    %v638 = vld [vmem:[%s2 + $0x1d8] sm:$0xf]
    %v639 = vld [vmem:[%s2 + $0x1dc] sm:$0xf]
    %v640 = vld [vmem:[%s2 + $0x1e0] sm:$0xf]
    %v641 = vld [vmem:[%s2 + $0x1e4] sm:$0xf]
    %v642 = vld [vmem:[%s2 + $0x1e8] sm:$0xf]
    %v643 = vld [vmem:[%s2 + $0x1ec] sm:$0xf]
    %v644 = vld [vmem:[%s2 + $0x1f0] sm:$0xf]
    %v645 = vld [vmem:[%s2 + $0x1f4] sm:$0xf]
    %v646 = vld [vmem:[%s2 + $0x1f8] sm:$0xf]
    %v647 = vld [vmem:[%s2 + $0x1fc] sm:$0xf]
    %v648 = vld [vmem:[%s2 + $0x200] sm:$0xf]
    %v649 = vld [vmem:[%s2 + $0x204] sm:$0xf]
    %v650 = vld [vmem:[%s2 + $0x208] sm:$0xf]
    %v651 = vld [vmem:[%s2 + $0x20c] sm:$0xf]
    %v652 = vld [vmem:[%s2 + $0x210] sm:$0xf]
    %v653 = vld [vmem:[%s2 + $0x214] sm:$0xf]
    %v654 = vld [vmem:[%s2 + $0x218] sm:$0xf]
    %v655 = vld [vmem:[%s2 + $0x21c] sm:$0xf]
    %v656 = vld [vmem:[%s2 + $0x220] sm:$0xf]
    %v657 = vld [vmem:[%s2 + $0x224] sm:$0xf]
    %v658 = vld [vmem:[%s2 + $0x228] sm:$0xf]
    %v659 = vld [vmem:[%s2 + $0x22c] sm:$0xf]
    %v660 = vld [vmem:[%s2 + $0x230] sm:$0xf]
    %v661 = vld [vmem:[%s2 + $0x234] sm:$0xf]
    %v662 = vld [vmem:[%s2 + $0x238] sm:$0xf]
    %v663 = vld [vmem:[%s2 + $0x23c] sm:$0xf]
    %v664 = vld [vmem:[%s2 + $0x240] sm:$0xf]
    %v665 = vld [vmem:[%s2 + $0x244] sm:$0xf]
    %v666 = vld [vmem:[%s2 + $0x248] sm:$0xf]
    %v667 = vld [vmem:[%s2 + $0x24c] sm:$0xf]
    %v668 = vld [vmem:[%s2 + $0x250] sm:$0xf]
    %v669 = vld [vmem:[%s2 + $0x254] sm:$0xf]
    %v670 = vld [vmem:[%s2 + $0x258] sm:$0xf]
    %v671 = vld [vmem:[%s2 + $0x25c] sm:$0xf]
    %v672 = vld [vmem:[%s2 + $0x260] sm:$0xf]
    %v673 = vld [vmem:[%s2 + $0x264] sm:$0xf]
    %v674 = vld [vmem:[%s2 + $0x268] sm:$0xf]
    %v675 = vld [vmem:[%s2 + $0x26c] sm:$0xf]
    %v676 = vld [vmem:[%s2 + $0x270] sm:$0xf]
    %v677 = vld [vmem:[%s2 + $0x274] sm:$0xf]
    %v678 = vld [vmem:[%s2 + $0x278] sm:$0xf]
    %v679 = vld [vmem:[%s2 + $0x27c] sm:$0xf]
    %v680 = vld [vmem:[%s2 + $0x280] sm:$0xf]
    %v681 = vld [vmem:[%s2 + $0x284] sm:$0xf]
    %v682 = vld [vmem:[%s2 + $0x288] sm:$0xf]
    %v683 = vld [vmem:[%s2 + $0x28c] sm:$0xf]
    %v684 = vld [vmem:[%s2 + $0x290] sm:$0xf]
    %v685 = vld [vmem:[%s2 + $0x294] sm:$0xf]
    %v686 = vld [vmem:[%s2 + $0x298] sm:$0xf]
    %v687 = vld [vmem:[%s2 + $0x29c] sm:$0xf]
    %v688 = vld [vmem:[%s2 + $0x2a0] sm:$0xf]
    %v689 = vld [vmem:[%s2 + $0x2a4] sm:$0xf]
    %v690 = vld [vmem:[%s2 + $0x2a8] sm:$0xf]
    %v691 = vld [vmem:[%s2 + $0x2ac] sm:$0xf]
    %v692 = vld [vmem:[%s2 + $0x2b0] sm:$0xf]
    %v693 = vld [vmem:[%s2 + $0x2b4] sm:$0xf]
    %v694 = vld [vmem:[%s2 + $0x2b8] sm:$0xf]
    %v695 = vld [vmem:[%s2 + $0x2bc] sm:$0xf]
    %v696 = vld [vmem:[%s2 + $0x2c0] sm:$0xf]
    %v697 = vld [vmem:[%s2 + $0x2c4] sm:$0xf]
    %v698 = vld [vmem:[%s2 + $0x2c8] sm:$0xf]
    %v699 = vld [vmem:[%s2 + $0x2cc] sm:$0xf]
    %v700 = vld [vmem:[%s2 + $0x2d0] sm:$0xf]
    %v701 = vld [vmem:[%s2 + $0x2d4] sm:$0xf]
    %v702 = vld [vmem:[%s2 + $0x2d8] sm:$0xf]
    %v703 = vld [vmem:[%s2 + $0x2dc] sm:$0xf]
    %v704 = vld [vmem:[%s2 + $0x2e0] sm:$0xf]
    %v705 = vld [vmem:[%s2 + $0x2e4] sm:$0xf]
    %v706 = vld [vmem:[%s2 + $0x2e8] sm:$0xf]
    %v707 = vld [vmem:[%s2 + $0x2ec] sm:$0xf]
    %v708 = vld [vmem:[%s2 + $0x2f0] sm:$0xf]
    %v709 = vld [vmem:[%s2 + $0x2f4] sm:$0xf]
    %v710 = vld [vmem:[%s2 + $0x2f8] sm:$0xf]
    %v711 = vld [vmem:[%s2 + $0x2fc] sm:$0xf]
    %v712 = vld [vmem:[%s2 + $0x300] sm:$0xf]
    %v713 = vld [vmem:[%s2 + $0x304] sm:$0xf]
    %v714 = vld [vmem:[%s2 + $0x308] sm:$0xf]
    %v715 = vld [vmem:[%s2 + $0x30c] sm:$0xf]
    %v716 = vld [vmem:[%s2 + $0x310] sm:$0xf]
    %v717 = vld [vmem:[%s2 + $0x314] sm:$0xf]
    %v718 = vld [vmem:[%s2 + $0x318] sm:$0xf]
    %v719 = vld [vmem:[%s2 + $0x31c] sm:$0xf]
    %v720 = vld [vmem:[%s2 + $0x320] sm:$0xf]
    %v721 = vld [vmem:[%s2 + $0x324] sm:$0xf]
    %v722 = vld [vmem:[%s2 + $0x328] sm:$0xf]
    %v723 = vld [vmem:[%s2 + $0x32c] sm:$0xf]
    %v724 = vld [vmem:[%s2 + $0x330] sm:$0xf]
    %v725 = vld [vmem:[%s2 + $0x334] sm:$0xf]
    %v726 = vld [vmem:[%s2 + $0x338] sm:$0xf]
    %v727 = vld [vmem:[%s2 + $0x33c] sm:$0xf]
    %v728 = vld [vmem:[%s2 + $0x340] sm:$0xf]
    %v729 = vld [vmem:[%s2 + $0x344] sm:$0xf]
    %v730 = vld [vmem:[%s2 + $0x348] sm:$0xf]
    %v731 = vld [vmem:[%s2 + $0x34c] sm:$0xf]
    %v732 = vld [vmem:[%s2 + $0x350] sm:$0xf]
    %v733 = vld [vmem:[%s2 + $0x354] sm:$0xf]
    %v734 = vld [vmem:[%s2 + $0x358] sm:$0xf]
    %v735 = vld [vmem:[%s2 + $0x35c] sm:$0xf]
    %v736 = vld [vmem:[%s2 + $0x360] sm:$0xf]
    %v737 = vld [vmem:[%s2 + $0x364] sm:$0xf]
    %v738 = vld [vmem:[%s2 + $0x368] sm:$0xf]
    %v739 = vld [vmem:[%s2 + $0x36c] sm:$0xf]
    %v740 = vld [vmem:[%s2 + $0x370] sm:$0xf]
    %v741 = vld [vmem:[%s2 + $0x374] sm:$0xf]
    %v742 = vld [vmem:[%s2 + $0x378] sm:$0xf]
    %v743 = vld [vmem:[%s2 + $0x37c] sm:$0xf]
    %v744 = vld [vmem:[%s2 + $0x380] sm:$0xf]
    %v745 = vld [vmem:[%s2 + $0x384] sm:$0xf]
    %v746 = vld [vmem:[%s2 + $0x388] sm:$0xf]
    %v747 = vld [vmem:[%s2 + $0x38c] sm:$0xf]
    %v748 = vld [vmem:[%s2 + $0x390] sm:$0xf]
    %v749 = vld [vmem:[%s2 + $0x394] sm:$0xf]
    %v750 = vld [vmem:[%s2 + $0x398] sm:$0xf]
    %v751 = vld [vmem:[%s2 + $0x39c] sm:$0xf]
    %v752 = vld [vmem:[%s2 + $0x3a0] sm:$0xf]
    %v753 = vld [vmem:[%s2 + $0x3a4] sm:$0xf]
    %v754 = vld [vmem:[%s2 + $0x3a8] sm:$0xf]
    %v755 = vld [vmem:[%s2 + $0x3ac] sm:$0xf]
    %v756 = vld [vmem:[%s2 + $0x3b0] sm:$0xf]
    %v757 = vld [vmem:[%s2 + $0x3b4] sm:$0xf]
    %v758 = vld [vmem:[%s2 + $0x3b8] sm:$0xf]
    %v759 = vld [vmem:[%s2 + $0x3bc] sm:$0xf]
    %v760 = vld [vmem:[%s2 + $0x3c0] sm:$0xf]
    %v761 = vld [vmem:[%s2 + $0x3c4] sm:$0xf]
    %v762 = vld [vmem:[%s2 + $0x3c8] sm:$0xf]
    %v763 = vld [vmem:[%s2 + $0x3cc] sm:$0xf]
    %v764 = vld [vmem:[%s2 + $0x3d0] sm:$0xf]
    %v765 = vld [vmem:[%s2 + $0x3d4] sm:$0xf]
    %v766 = vld [vmem:[%s2 + $0x3d8] sm:$0xf]
    %v767 = vld [vmem:[%s2 + $0x3dc] sm:$0xf]
    %v768 = vld [vmem:[%s2 + $0x3e0] sm:$0xf]
    %v769 = vld [vmem:[%s2 + $0x3e4] sm:$0xf]
    %v770 = vld [vmem:[%s2 + $0x3e8] sm:$0xf]
    %v771 = vld [vmem:[%s2 + $0x3ec] sm:$0xf]
    %v772 = vld [vmem:[%s2 + $0x3f0] sm:$0xf]
    %v773 = vld [vmem:[%s2 + $0x3f4] sm:$0xf]
    %v774 = vld [vmem:[%s2 + $0x3f8] sm:$0xf]
    %v775 = vld [vmem:[%s2 + $0x3fc] sm:$0xf]
    %777 = vst [vmem:[#allocation1] ss:$9 sm:$0xff] %v518
    %v778 = vld [vmem:[#allocation1] sm:$0xff]
    %v779 = vld [vmem:[#allocation1 + $0x9] sm:$0xff]
    %v780 = vld [vmem:[#allocation1 + $0x12] sm:$0xff]
    %v781 = vld [vmem:[#allocation1 + $0x1b] sm:$0xff]
    %v782 = vld [vmem:[#allocation1 + $0x24] sm:$0xff]
    %v783 = vld [vmem:[#allocation1 + $0x2d] sm:$0xff]
    %v784 = vld [vmem:[#allocation1 + $0x36] sm:$0xff]
    %v785 = vld [vmem:[#allocation1 + $0x3f] sm:$0xff]
    %787 = vst [vmem:[#allocation1] ss:$9 sm:$0xff] %v519
    %v788 = vld [vmem:[#allocation1] sm:$0xff]
    %v789 = vld [vmem:[#allocation1 + $0x9] sm:$0xff]
    %v790 = vld [vmem:[#allocation1 + $0x12] sm:$0xff]
    %v791 = vld [vmem:[#allocation1 + $0x1b] sm:$0xff]
    %v792 = vld [vmem:[#allocation1 + $0x24] sm:$0xff]
    %v793 = vld [vmem:[#allocation1 + $0x2d] sm:$0xff]
    %v794 = vld [vmem:[#allocation1 + $0x36] sm:$0xff]
    %v795 = vld [vmem:[#allocation1 + $0x3f] sm:$0xff]
    %v1068 = vunpack.c.l.b16 %v520
    %v1069 = vunpack.c.l.b16 %v521
    %v1070 = vunpack.c.l.b16 %v522
    %v1071 = vunpack.c.l.b16 %v523
    %v1072 = vunpack.c.l.b16 %v524
    %v1073 = vunpack.c.l.b16 %v525
    %v1074 = vunpack.c.l.b16 %v526
    %v1075 = vunpack.c.l.b16 %v527
    %v1076 = vunpack.c.l.b16 %v528
    %v1077 = vunpack.c.l.b16 %v529
    %v1078 = vunpack.c.l.b16 %v530
    %v1079 = vunpack.c.l.b16 %v531
    %v1080 = vunpack.c.l.b16 %v532
    %v1081 = vunpack.c.l.b16 %v533
    %v1082 = vunpack.c.l.b16 %v534
    %v1083 = vunpack.c.l.b16 %v535
    %v1084 = vunpack.c.l.b16 %v536
    %v1085 = vunpack.c.l.b16 %v537
    %v1086 = vunpack.c.l.b16 %v538
    %v1087 = vunpack.c.l.b16 %v539
    %v1088 = vunpack.c.l.b16 %v540
    %v1089 = vunpack.c.l.b16 %v541
    %v1090 = vunpack.c.l.b16 %v542
    %v1091 = vunpack.c.l.b16 %v543
    %v1092 = vunpack.c.l.b16 %v544
    %v1093 = vunpack.c.l.b16 %v545
    %v1094 = vunpack.c.l.b16 %v546
    %v1095 = vunpack.c.l.b16 %v547
    %v1096 = vunpack.c.l.b16 %v548
    %v1097 = vunpack.c.l.b16 %v549
    %v1098 = vunpack.c.l.b16 %v550
    %v1099 = vunpack.c.l.b16 %v551
    %v1100 = vunpack.c.l.b16 %v552
    %v1101 = vunpack.c.l.b16 %v553
    %v1102 = vunpack.c.l.b16 %v554
    %v1103 = vunpack.c.l.b16 %v555
    %v1104 = vunpack.c.l.b16 %v556
    %v1105 = vunpack.c.l.b16 %v557
    %v1106 = vunpack.c.l.b16 %v558
    %v1107 = vunpack.c.l.b16 %v559
    %v1108 = vunpack.c.l.b16 %v560
    %v1109 = vunpack.c.l.b16 %v561
    %v1110 = vunpack.c.l.b16 %v562
    %v1111 = vunpack.c.l.b16 %v563
    %v1112 = vunpack.c.l.b16 %v564
    %v1113 = vunpack.c.l.b16 %v565
    %v1114 = vunpack.c.l.b16 %v566
    %v1115 = vunpack.c.l.b16 %v567
    %v1116 = vunpack.c.l.b16 %v568
    %v1117 = vunpack.c.l.b16 %v569
    %v1118 = vunpack.c.l.b16 %v570
    %v1119 = vunpack.c.l.b16 %v571
    %v1120 = vunpack.c.l.b16 %v572
    %v1121 = vunpack.c.l.b16 %v573
    %v1122 = vunpack.c.l.b16 %v574
    %v1123 = vunpack.c.l.b16 %v575
    %v1124 = vunpack.c.l.b16 %v576
    %v1125 = vunpack.c.l.b16 %v577
    %v1126 = vunpack.c.l.b16 %v578
    %v1127 = vunpack.c.l.b16 %v579
    %v1128 = vunpack.c.l.b16 %v580
    %v1129 = vunpack.c.l.b16 %v581
    %v1130 = vunpack.c.l.b16 %v582
    %v1131 = vunpack.c.l.b16 %v583
    %v1132 = vunpack.c.l.b16 %v584
    %v1133 = vunpack.c.l.b16 %v585
    %v1134 = vunpack.c.l.b16 %v586
    %v1135 = vunpack.c.l.b16 %v587
    %v1136 = vunpack.c.l.b16 %v588
    %v1137 = vunpack.c.l.b16 %v589
    %v1138 = vunpack.c.l.b16 %v590
    %v1139 = vunpack.c.l.b16 %v591
    %v1140 = vunpack.c.l.b16 %v592
    %v1141 = vunpack.c.l.b16 %v593
    %v1142 = vunpack.c.l.b16 %v594
    %v1143 = vunpack.c.l.b16 %v595
    %v1144 = vunpack.c.l.b16 %v596
    %v1145 = vunpack.c.l.b16 %v597
    %v1146 = vunpack.c.l.b16 %v598
    %v1147 = vunpack.c.l.b16 %v599
    %v1148 = vunpack.c.l.b16 %v600
    %v1149 = vunpack.c.l.b16 %v601
    %v1150 = vunpack.c.l.b16 %v602
    %v1151 = vunpack.c.l.b16 %v603
    %v1152 = vunpack.c.l.b16 %v604
    %v1153 = vunpack.c.l.b16 %v605
    %v1154 = vunpack.c.l.b16 %v606
    %v1155 = vunpack.c.l.b16 %v607
    %v1156 = vunpack.c.l.b16 %v608
    %v1157 = vunpack.c.l.b16 %v609
    %v1158 = vunpack.c.l.b16 %v610
    %v1159 = vunpack.c.l.b16 %v611
    %v1160 = vunpack.c.l.b16 %v612
    %v1161 = vunpack.c.l.b16 %v613
    %v1162 = vunpack.c.l.b16 %v614
    %v1163 = vunpack.c.l.b16 %v615
    %v1164 = vunpack.c.l.b16 %v616
    %v1165 = vunpack.c.l.b16 %v617
    %v1166 = vunpack.c.l.b16 %v618
    %v1167 = vunpack.c.l.b16 %v619
    %v1168 = vunpack.c.l.b16 %v620
    %v1169 = vunpack.c.l.b16 %v621
    %v1170 = vunpack.c.l.b16 %v622
    %v1171 = vunpack.c.l.b16 %v623
    %v1172 = vunpack.c.l.b16 %v624
    %v1173 = vunpack.c.l.b16 %v625
    %v1174 = vunpack.c.l.b16 %v626
    %v1175 = vunpack.c.l.b16 %v627
    %v1176 = vunpack.c.l.b16 %v628
    %v1177 = vunpack.c.l.b16 %v629
    %v1178 = vunpack.c.l.b16 %v630
    %v1179 = vunpack.c.l.b16 %v631
    %v1180 = vunpack.c.l.b16 %v632
    %v1181 = vunpack.c.l.b16 %v633
    %v1182 = vunpack.c.l.b16 %v634
    %v1183 = vunpack.c.l.b16 %v635
    %v1184 = vunpack.c.l.b16 %v636
    %v1185 = vunpack.c.l.b16 %v637
    %v1186 = vunpack.c.l.b16 %v638
    %v1187 = vunpack.c.l.b16 %v639
    %v1188 = vunpack.c.l.b16 %v640
    %v1189 = vunpack.c.l.b16 %v641
    %v1190 = vunpack.c.l.b16 %v642
    %v1191 = vunpack.c.l.b16 %v643
    %v1192 = vunpack.c.l.b16 %v644
    %v1193 = vunpack.c.l.b16 %v645
    %v1194 = vunpack.c.l.b16 %v646
    %v1195 = vunpack.c.l.b16 %v647
    %v1196 = vunpack.c.l.b16 %v648
    %v1197 = vunpack.c.l.b16 %v649
    %v1198 = vunpack.c.l.b16 %v650
    %v1199 = vunpack.c.l.b16 %v651
    %v1200 = vunpack.c.l.b16 %v652
    %v1201 = vunpack.c.l.b16 %v653
    %v1202 = vunpack.c.l.b16 %v654
    %v1203 = vunpack.c.l.b16 %v655
    %v1204 = vunpack.c.l.b16 %v656
    %v1205 = vunpack.c.l.b16 %v657
    %v1206 = vunpack.c.l.b16 %v658
    %v1207 = vunpack.c.l.b16 %v659
    %v1208 = vunpack.c.l.b16 %v660
    %v1209 = vunpack.c.l.b16 %v661
    %v1210 = vunpack.c.l.b16 %v662
    %v1211 = vunpack.c.l.b16 %v663
    %v1212 = vunpack.c.l.b16 %v664
    %v1213 = vunpack.c.l.b16 %v665
    %v1214 = vunpack.c.l.b16 %v666
    %v1215 = vunpack.c.l.b16 %v667
    %v1216 = vunpack.c.l.b16 %v668
    %v1217 = vunpack.c.l.b16 %v669
    %v1218 = vunpack.c.l.b16 %v670
    %v1219 = vunpack.c.l.b16 %v671
    %v1220 = vunpack.c.l.b16 %v672
    %v1221 = vunpack.c.l.b16 %v673
    %v1222 = vunpack.c.l.b16 %v674
    %v1223 = vunpack.c.l.b16 %v675
    %v1224 = vunpack.c.l.b16 %v676
    %v1225 = vunpack.c.l.b16 %v677
    %v1226 = vunpack.c.l.b16 %v678
    %v1227 = vunpack.c.l.b16 %v679
    %v1228 = vunpack.c.l.b16 %v680
    %v1229 = vunpack.c.l.b16 %v681
    %v1230 = vunpack.c.l.b16 %v682
    %v1231 = vunpack.c.l.b16 %v683
    %v1232 = vunpack.c.l.b16 %v684
    %v1233 = vunpack.c.l.b16 %v685
    %v1234 = vunpack.c.l.b16 %v686
    %v1235 = vunpack.c.l.b16 %v687
    %v1236 = vunpack.c.l.b16 %v688
    %v1237 = vunpack.c.l.b16 %v689
    %v1238 = vunpack.c.l.b16 %v690
    %v1239 = vunpack.c.l.b16 %v691
    %v1240 = vunpack.c.l.b16 %v692
    %v1241 = vunpack.c.l.b16 %v693
    %v1242 = vunpack.c.l.b16 %v694
    %v1243 = vunpack.c.l.b16 %v695
    %v1244 = vunpack.c.l.b16 %v696
    %v1245 = vunpack.c.l.b16 %v697
    %v1246 = vunpack.c.l.b16 %v698
    %v1247 = vunpack.c.l.b16 %v699
    %v1248 = vunpack.c.l.b16 %v700
    %v1249 = vunpack.c.l.b16 %v701
    %v1250 = vunpack.c.l.b16 %v702
    %v1251 = vunpack.c.l.b16 %v703
    %v1252 = vunpack.c.l.b16 %v704
    %v1253 = vunpack.c.l.b16 %v705
    %v1254 = vunpack.c.l.b16 %v706
    %v1255 = vunpack.c.l.b16 %v707
    %v1256 = vunpack.c.l.b16 %v708
    %v1257 = vunpack.c.l.b16 %v709
    %v1258 = vunpack.c.l.b16 %v710
    %v1259 = vunpack.c.l.b16 %v711
    %v1260 = vunpack.c.l.b16 %v712
    %v1261 = vunpack.c.l.b16 %v713
    %v1262 = vunpack.c.l.b16 %v714
    %v1263 = vunpack.c.l.b16 %v715
    %v1264 = vunpack.c.l.b16 %v716
    %v1265 = vunpack.c.l.b16 %v717
    %v1266 = vunpack.c.l.b16 %v718
    %v1267 = vunpack.c.l.b16 %v719
    %v1268 = vunpack.c.l.b16 %v720
    %v1269 = vunpack.c.l.b16 %v721
    %v1270 = vunpack.c.l.b16 %v722
    %v1271 = vunpack.c.l.b16 %v723
    %v1272 = vunpack.c.l.b16 %v724
    %v1273 = vunpack.c.l.b16 %v725
    %v1274 = vunpack.c.l.b16 %v726
    %v1275 = vunpack.c.l.b16 %v727
    %v1276 = vunpack.c.l.b16 %v728
    %v1277 = vunpack.c.l.b16 %v729
    %v1278 = vunpack.c.l.b16 %v730
    %v1279 = vunpack.c.l.b16 %v731
    %v1280 = vunpack.c.l.b16 %v732
    %v1281 = vunpack.c.l.b16 %v733
    %v1282 = vunpack.c.l.b16 %v734
    %v1283 = vunpack.c.l.b16 %v735
    %v1284 = vunpack.c.l.b16 %v736
    %v1285 = vunpack.c.l.b16 %v737
    %v1286 = vunpack.c.l.b16 %v738
    %v1287 = vunpack.c.l.b16 %v739
    %v1288 = vunpack.c.l.b16 %v740
    %v1289 = vunpack.c.l.b16 %v741
    %v1290 = vunpack.c.l.b16 %v742
    %v1291 = vunpack.c.l.b16 %v743
    %v1292 = vunpack.c.l.b16 %v744
    %v1293 = vunpack.c.l.b16 %v745
    %v1294 = vunpack.c.l.b16 %v746
    %v1295 = vunpack.c.l.b16 %v747
    %v1296 = vunpack.c.l.b16 %v748
    %v1297 = vunpack.c.l.b16 %v749
    %v1298 = vunpack.c.l.b16 %v750
    %v1299 = vunpack.c.l.b16 %v751
    %v1300 = vunpack.c.l.b16 %v752
    %v1301 = vunpack.c.l.b16 %v753
    %v1302 = vunpack.c.l.b16 %v754
    %v1303 = vunpack.c.l.b16 %v755
    %v1304 = vunpack.c.l.b16 %v756
    %v1305 = vunpack.c.l.b16 %v757
    %v1306 = vunpack.c.l.b16 %v758
    %v1307 = vunpack.c.l.b16 %v759
    %v1308 = vunpack.c.l.b16 %v760
    %v1309 = vunpack.c.l.b16 %v761
    %v1310 = vunpack.c.l.b16 %v762
    %v1311 = vunpack.c.l.b16 %v763
    %v1312 = vunpack.c.l.b16 %v764
    %v1313 = vunpack.c.l.b16 %v765
    %v1314 = vunpack.c.l.b16 %v766
    %v1315 = vunpack.c.l.b16 %v767
    %v1316 = vunpack.c.l.b16 %v768
    %v1317 = vunpack.c.l.b16 %v769
    %v1318 = vunpack.c.l.b16 %v770
    %v1319 = vunpack.c.l.b16 %v771
    %v1320 = vunpack.c.l.b16 %v772
    %v1321 = vunpack.c.l.b16 %v773
    %v1322 = vunpack.c.l.b16 %v774
    %v1323 = vunpack.c.l.b16 %v775
    %v1324 = vpack.c.b16 %v1069, %v1068
    %v1325 = vpack.c.b16 %v1071, %v1070
    %v1326 = vpack.c.b16 %v1073, %v1072
    %v1327 = vpack.c.b16 %v1075, %v1074
    %v1328 = vpack.c.b16 %v1077, %v1076
    %v1329 = vpack.c.b16 %v1079, %v1078
    %v1330 = vpack.c.b16 %v1081, %v1080
    %v1331 = vpack.c.b16 %v1083, %v1082
    %v1332 = vpack.c.b16 %v1085, %v1084
    %v1333 = vpack.c.b16 %v1087, %v1086
    %v1334 = vpack.c.b16 %v1089, %v1088
    %v1335 = vpack.c.b16 %v1091, %v1090
    %v1336 = vpack.c.b16 %v1093, %v1092
    %v1337 = vpack.c.b16 %v1095, %v1094
    %v1338 = vpack.c.b16 %v1097, %v1096
    %v1339 = vpack.c.b16 %v1099, %v1098
    %v1340 = vpack.c.b16 %v1101, %v1100
    %v1341 = vpack.c.b16 %v1103, %v1102
    %v1342 = vpack.c.b16 %v1105, %v1104
    %v1343 = vpack.c.b16 %v1107, %v1106
    %v1344 = vpack.c.b16 %v1109, %v1108
    %v1345 = vpack.c.b16 %v1111, %v1110
    %v1346 = vpack.c.b16 %v1113, %v1112
    %v1347 = vpack.c.b16 %v1115, %v1114
    %v1348 = vpack.c.b16 %v1117, %v1116
    %v1349 = vpack.c.b16 %v1119, %v1118
    %v1350 = vpack.c.b16 %v1121, %v1120
    %v1351 = vpack.c.b16 %v1123, %v1122
    %v1352 = vpack.c.b16 %v1125, %v1124
    %v1353 = vpack.c.b16 %v1127, %v1126
    %v1354 = vpack.c.b16 %v1129, %v1128
    %v1355 = vpack.c.b16 %v1131, %v1130
    %v1356 = vpack.c.b16 %v1133, %v1132
    %v1357 = vpack.c.b16 %v1135, %v1134
    %v1358 = vpack.c.b16 %v1137, %v1136
    %v1359 = vpack.c.b16 %v1139, %v1138
    %v1360 = vpack.c.b16 %v1141, %v1140
    %v1361 = vpack.c.b16 %v1143, %v1142
    %v1362 = vpack.c.b16 %v1145, %v1144
    %v1363 = vpack.c.b16 %v1147, %v1146
    %v1364 = vpack.c.b16 %v1149, %v1148
    %v1365 = vpack.c.b16 %v1151, %v1150
    %v1366 = vpack.c.b16 %v1153, %v1152
    %v1367 = vpack.c.b16 %v1155, %v1154
    %v1368 = vpack.c.b16 %v1157, %v1156
    %v1369 = vpack.c.b16 %v1159, %v1158
    %v1370 = vpack.c.b16 %v1161, %v1160
    %v1371 = vpack.c.b16 %v1163, %v1162
    %v1372 = vpack.c.b16 %v1165, %v1164
    %v1373 = vpack.c.b16 %v1167, %v1166
    %v1374 = vpack.c.b16 %v1169, %v1168
    %v1375 = vpack.c.b16 %v1171, %v1170
    %v1376 = vpack.c.b16 %v1173, %v1172
    %v1377 = vpack.c.b16 %v1175, %v1174
    %v1378 = vpack.c.b16 %v1177, %v1176
    %v1379 = vpack.c.b16 %v1179, %v1178
    %v1380 = vpack.c.b16 %v1181, %v1180
    %v1381 = vpack.c.b16 %v1183, %v1182
    %v1382 = vpack.c.b16 %v1185, %v1184
    %v1383 = vpack.c.b16 %v1187, %v1186
    %v1384 = vpack.c.b16 %v1189, %v1188
    %v1385 = vpack.c.b16 %v1191, %v1190
    %v1386 = vpack.c.b16 %v1193, %v1192
    %v1387 = vpack.c.b16 %v1195, %v1194
    %v1388 = vpack.c.b16 %v1197, %v1196
    %v1389 = vpack.c.b16 %v1199, %v1198
    %v1390 = vpack.c.b16 %v1201, %v1200
    %v1391 = vpack.c.b16 %v1203, %v1202
    %v1392 = vpack.c.b16 %v1205, %v1204
    %v1393 = vpack.c.b16 %v1207, %v1206
    %v1394 = vpack.c.b16 %v1209, %v1208
    %v1395 = vpack.c.b16 %v1211, %v1210
    %v1396 = vpack.c.b16 %v1213, %v1212
    %v1397 = vpack.c.b16 %v1215, %v1214
    %v1398 = vpack.c.b16 %v1217, %v1216
    %v1399 = vpack.c.b16 %v1219, %v1218
    %v1400 = vpack.c.b16 %v1221, %v1220
    %v1401 = vpack.c.b16 %v1223, %v1222
    %v1402 = vpack.c.b16 %v1225, %v1224
    %v1403 = vpack.c.b16 %v1227, %v1226
    %v1404 = vpack.c.b16 %v1229, %v1228
    %v1405 = vpack.c.b16 %v1231, %v1230
    %v1406 = vpack.c.b16 %v1233, %v1232
    %v1407 = vpack.c.b16 %v1235, %v1234
    %v1408 = vpack.c.b16 %v1237, %v1236
    %v1409 = vpack.c.b16 %v1239, %v1238
    %v1410 = vpack.c.b16 %v1241, %v1240
    %v1411 = vpack.c.b16 %v1243, %v1242
    %v1412 = vpack.c.b16 %v1245, %v1244
    %v1413 = vpack.c.b16 %v1247, %v1246
    %v1414 = vpack.c.b16 %v1249, %v1248
    %v1415 = vpack.c.b16 %v1251, %v1250
    %v1416 = vpack.c.b16 %v1253, %v1252
    %v1417 = vpack.c.b16 %v1255, %v1254
    %v1418 = vpack.c.b16 %v1257, %v1256
    %v1419 = vpack.c.b16 %v1259, %v1258
    %v1420 = vpack.c.b16 %v1261, %v1260
    %v1421 = vpack.c.b16 %v1263, %v1262
    %v1422 = vpack.c.b16 %v1265, %v1264
    %v1423 = vpack.c.b16 %v1267, %v1266
    %v1424 = vpack.c.b16 %v1269, %v1268
    %v1425 = vpack.c.b16 %v1271, %v1270
    %v1426 = vpack.c.b16 %v1273, %v1272
    %v1427 = vpack.c.b16 %v1275, %v1274
    %v1428 = vpack.c.b16 %v1277, %v1276
    %v1429 = vpack.c.b16 %v1279, %v1278
    %v1430 = vpack.c.b16 %v1281, %v1280
    %v1431 = vpack.c.b16 %v1283, %v1282
    %v1432 = vpack.c.b16 %v1285, %v1284
    %v1433 = vpack.c.b16 %v1287, %v1286
    %v1434 = vpack.c.b16 %v1289, %v1288
    %v1435 = vpack.c.b16 %v1291, %v1290
    %v1436 = vpack.c.b16 %v1293, %v1292
    %v1437 = vpack.c.b16 %v1295, %v1294
    %v1438 = vpack.c.b16 %v1297, %v1296
    %v1439 = vpack.c.b16 %v1299, %v1298
    %v1440 = vpack.c.b16 %v1301, %v1300
    %v1441 = vpack.c.b16 %v1303, %v1302
    %v1442 = vpack.c.b16 %v1305, %v1304
    %v1443 = vpack.c.b16 %v1307, %v1306
    %v1444 = vpack.c.b16 %v1309, %v1308
    %v1445 = vpack.c.b16 %v1311, %v1310
    %v1446 = vpack.c.b16 %v1313, %v1312
    %v1447 = vpack.c.b16 %v1315, %v1314
    %v1448 = vpack.c.b16 %v1317, %v1316
    %v1449 = vpack.c.b16 %v1319, %v1318
    %v1450 = vpack.c.b16 %v1321, %v1320
    %v1451 = vpack.c.b16 %v1323, %v1322
    %1580 = vmatpush.bf16.msra.mxu0 %v1331
    %1581 = vmatpush.bf16.msra.mxu0 %v1330
    %1582 = vmatpush.bf16.msra.mxu0 %v1329
    %1583 = vmatpush.bf16.msra.mxu0 %v1328
    %1584 = vmatpush.bf16.msra.mxu0 %v1327
    %1585 = vmatpush.bf16.msra.mxu0 %v1326
    %1586 = vmatpush.bf16.msra.mxu0 %v1325
    %1587 = vmatpush.bf16.msra.mxu0 %v1324
    %1588 = vmatmul.bf16.gmra.mxu0 %v778
    %v1589 = vpop.f32.mrf.mxu0
    %v1590 = vadd.f32 0.0, %v1589
    %v1591 = vpop.f32.mrf.mxu0
    %1592 = vdwg.mxu0
    %1593 = vmatpush.bf16.msra.mxu0 %v1339
    %1594 = vmatpush.bf16.msra.mxu0 %v1338
    %1595 = vmatpush.bf16.msra.mxu0 %v1337
    %1596 = vmatpush.bf16.msra.mxu0 %v1336
    %1597 = vmatpush.bf16.msra.mxu0 %v1335
    %1598 = vmatpush.bf16.msra.mxu0 %v1334
    %1599 = vmatpush.bf16.msra.mxu0 %v1333
    %1600 = vmatpush.bf16.msra.mxu0 %v1332
    %1601 = vmatmul.bf16.gmra.mxu0 %v779
    %v1602 = vpop.f32.mrf.mxu0
    %v1603 = vadd.f32 %v1590, %v1602
    %v1604 = vpop.f32.mrf.mxu0
    %1605 = vdwg.mxu0
    %1606 = vmatpush.bf16.msra.mxu0 %v1347
    %1607 = vmatpush.bf16.msra.mxu0 %v1346
    %1608 = vmatpush.bf16.msra.mxu0 %v1345
    %1609 = vmatpush.bf16.msra.mxu0 %v1344
    %1610 = vmatpush.bf16.msra.mxu0 %v1343
    %1611 = vmatpush.bf16.msra.mxu0 %v1342
    %1612 = vmatpush.bf16.msra.mxu0 %v1341
    %1613 = vmatpush.bf16.msra.mxu0 %v1340
    %1614 = vmatmul.bf16.gmra.mxu0 %v780
    %v1615 = vpop.f32.mrf.mxu0
    %v1616 = vadd.f32 %v1603, %v1615
    %v1617 = vpop.f32.mrf.mxu0
    %1618 = vdwg.mxu0
    %1619 = vmatpush.bf16.msra.mxu0 %v1355
    %1620 = vmatpush.bf16.msra.mxu0 %v1354
    %1621 = vmatpush.bf16.msra.mxu0 %v1353
    %1622 = vmatpush.bf16.msra.mxu0 %v1352
    %1623 = vmatpush.bf16.msra.mxu0 %v1351
    %1624 = vmatpush.bf16.msra.mxu0 %v1350
    %1625 = vmatpush.bf16.msra.mxu0 %v1349
    %1626 = vmatpush.bf16.msra.mxu0 %v1348
    %1627 = vmatmul.bf16.gmra.mxu0 %v781
    %v1628 = vpop.f32.mrf.mxu0
    %v1629 = vadd.f32 %v1616, %v1628
    %v1630 = vpop.f32.mrf.mxu0
    %1631 = vdwg.mxu0
    %1632 = vmatpush.bf16.msra.mxu0 %v1363
    %1633 = vmatpush.bf16.msra.mxu0 %v1362
    %1634 = vmatpush.bf16.msra.mxu0 %v1361
    %1635 = vmatpush.bf16.msra.mxu0 %v1360
    %1636 = vmatpush.bf16.msra.mxu0 %v1359
    %1637 = vmatpush.bf16.msra.mxu0 %v1358
    %1638 = vmatpush.bf16.msra.mxu0 %v1357
    %1639 = vmatpush.bf16.msra.mxu0 %v1356
    %1640 = vmatmul.bf16.gmra.mxu0 %v782
    %v1641 = vpop.f32.mrf.mxu0
    %v1642 = vadd.f32 %v1629, %v1641
    %v1643 = vpop.f32.mrf.mxu0
    %1644 = vdwg.mxu0
    %1645 = vmatpush.bf16.msra.mxu0 %v1371
    %1646 = vmatpush.bf16.msra.mxu0 %v1370
    %1647 = vmatpush.bf16.msra.mxu0 %v1369
    %1648 = vmatpush.bf16.msra.mxu0 %v1368
    %1649 = vmatpush.bf16.msra.mxu0 %v1367
    %1650 = vmatpush.bf16.msra.mxu0 %v1366
    %1651 = vmatpush.bf16.msra.mxu0 %v1365
    %1652 = vmatpush.bf16.msra.mxu0 %v1364
    %1653 = vmatmul.bf16.gmra.mxu0 %v783
    %v1654 = vpop.f32.mrf.mxu0
    %v1655 = vadd.f32 %v1642, %v1654
    %v1656 = vpop.f32.mrf.mxu0
    %1657 = vdwg.mxu0
    %1658 = vmatpush.bf16.msra.mxu0 %v1379
    %1659 = vmatpush.bf16.msra.mxu0 %v1378
    %1660 = vmatpush.bf16.msra.mxu0 %v1377
    %1661 = vmatpush.bf16.msra.mxu0 %v1376
    %1662 = vmatpush.bf16.msra.mxu0 %v1375
    %1663 = vmatpush.bf16.msra.mxu0 %v1374
    %1664 = vmatpush.bf16.msra.mxu0 %v1373
    %1665 = vmatpush.bf16.msra.mxu0 %v1372
    %1666 = vmatmul.bf16.gmra.mxu0 %v784
    %v1667 = vpop.f32.mrf.mxu0
    %v1668 = vadd.f32 %v1655, %v1667
    %v1669 = vpop.f32.mrf.mxu0
    %1670 = vdwg.mxu0
    %1671 = vmatpush.bf16.msra.mxu0 %v1387
    %1672 = vmatpush.bf16.msra.mxu0 %v1386
    %1673 = vmatpush.bf16.msra.mxu0 %v1385
    %1674 = vmatpush.bf16.msra.mxu0 %v1384
    %1675 = vmatpush.bf16.msra.mxu0 %v1383
    %1676 = vmatpush.bf16.msra.mxu0 %v1382
    %1677 = vmatpush.bf16.msra.mxu0 %v1381
    %1678 = vmatpush.bf16.msra.mxu0 %v1380
    %1679 = vmatmul.bf16.gmra.mxu0 %v785
    %v1680 = vpop.f32.mrf.mxu0
    %v1681 = vadd.f32 %v1668, %v1680
    %v1682 = vpop.f32.mrf.mxu0
    %1683 = vdwg.mxu0
    %1684 = vmatpush.bf16.msra.mxu0 %v1395
    %1685 = vmatpush.bf16.msra.mxu0 %v1394
    %1686 = vmatpush.bf16.msra.mxu0 %v1393
    %1687 = vmatpush.bf16.msra.mxu0 %v1392
    %1688 = vmatpush.bf16.msra.mxu0 %v1391
    %1689 = vmatpush.bf16.msra.mxu0 %v1390
    %1690 = vmatpush.bf16.msra.mxu0 %v1389
    %1691 = vmatpush.bf16.msra.mxu0 %v1388
    %1692 = vmatmul.bf16.gmra.mxu0 %v788
    %v1693 = vpop.f32.mrf.mxu0
    %v1694 = vadd.f32 %v1681, %v1693
    %v1695 = vpop.f32.mrf.mxu0
    %1696 = vdwg.mxu0
    %1697 = vmatpush.bf16.msra.mxu0 %v1403
    %1698 = vmatpush.bf16.msra.mxu0 %v1402
    %1699 = vmatpush.bf16.msra.mxu0 %v1401
    %1700 = vmatpush.bf16.msra.mxu0 %v1400
    %1701 = vmatpush.bf16.msra.mxu0 %v1399
    %1702 = vmatpush.bf16.msra.mxu0 %v1398
    %1703 = vmatpush.bf16.msra.mxu0 %v1397
    %1704 = vmatpush.bf16.msra.mxu0 %v1396
    %1705 = vmatmul.bf16.gmra.mxu0 %v789
    %v1706 = vpop.f32.mrf.mxu0
    %v1707 = vadd.f32 %v1694, %v1706
    %v1708 = vpop.f32.mrf.mxu0
    %1709 = vdwg.mxu0
    %1710 = vmatpush.bf16.msra.mxu0 %v1411
    %1711 = vmatpush.bf16.msra.mxu0 %v1410
    %1712 = vmatpush.bf16.msra.mxu0 %v1409
    %1713 = vmatpush.bf16.msra.mxu0 %v1408
    %1714 = vmatpush.bf16.msra.mxu0 %v1407
    %1715 = vmatpush.bf16.msra.mxu0 %v1406
    %1716 = vmatpush.bf16.msra.mxu0 %v1405
    %1717 = vmatpush.bf16.msra.mxu0 %v1404
    %1718 = vmatmul.bf16.gmra.mxu0 %v790
    %v1719 = vpop.f32.mrf.mxu0
    %v1720 = vadd.f32 %v1707, %v1719
    %v1721 = vpop.f32.mrf.mxu0
    %1722 = vdwg.mxu0
    %1723 = vmatpush.bf16.msra.mxu0 %v1419
    %1724 = vmatpush.bf16.msra.mxu0 %v1418
    %1725 = vmatpush.bf16.msra.mxu0 %v1417
    %1726 = vmatpush.bf16.msra.mxu0 %v1416
    %1727 = vmatpush.bf16.msra.mxu0 %v1415
    %1728 = vmatpush.bf16.msra.mxu0 %v1414
    %1729 = vmatpush.bf16.msra.mxu0 %v1413
    %1730 = vmatpush.bf16.msra.mxu0 %v1412
    %1731 = vmatmul.bf16.gmra.mxu0 %v791
    %v1732 = vpop.f32.mrf.mxu0
    %v1733 = vadd.f32 %v1720, %v1732
    %v1734 = vpop.f32.mrf.mxu0
    %1735 = vdwg.mxu0
    %1736 = vmatpush.bf16.msra.mxu0 %v1427
    %1737 = vmatpush.bf16.msra.mxu0 %v1426
    %1738 = vmatpush.bf16.msra.mxu0 %v1425
    %1739 = vmatpush.bf16.msra.mxu0 %v1424
    %1740 = vmatpush.bf16.msra.mxu0 %v1423
    %1741 = vmatpush.bf16.msra.mxu0 %v1422
    %1742 = vmatpush.bf16.msra.mxu0 %v1421
    %1743 = vmatpush.bf16.msra.mxu0 %v1420
    %1744 = vmatmul.bf16.gmra.mxu0 %v792
    %v1745 = vpop.f32.mrf.mxu0
    %v1746 = vadd.f32 %v1733, %v1745
    %v1747 = vpop.f32.mrf.mxu0
    %1748 = vdwg.mxu0
    %1749 = vmatpush.bf16.msra.mxu0 %v1435
    %1750 = vmatpush.bf16.msra.mxu0 %v1434
    %1751 = vmatpush.bf16.msra.mxu0 %v1433
    %1752 = vmatpush.bf16.msra.mxu0 %v1432
    %1753 = vmatpush.bf16.msra.mxu0 %v1431
    %1754 = vmatpush.bf16.msra.mxu0 %v1430
    %1755 = vmatpush.bf16.msra.mxu0 %v1429
    %1756 = vmatpush.bf16.msra.mxu0 %v1428
    %1757 = vmatmul.bf16.gmra.mxu0 %v793
    %v1758 = vpop.f32.mrf.mxu0
    %v1759 = vadd.f32 %v1746, %v1758
    %v1760 = vpop.f32.mrf.mxu0
    %1761 = vdwg.mxu0
    %1762 = vmatpush.bf16.msra.mxu0 %v1443
    %1763 = vmatpush.bf16.msra.mxu0 %v1442
    %1764 = vmatpush.bf16.msra.mxu0 %v1441
    %1765 = vmatpush.bf16.msra.mxu0 %v1440
    %1766 = vmatpush.bf16.msra.mxu0 %v1439
    %1767 = vmatpush.bf16.msra.mxu0 %v1438
    %1768 = vmatpush.bf16.msra.mxu0 %v1437
    %1769 = vmatpush.bf16.msra.mxu0 %v1436
    %1770 = vmatmul.bf16.gmra.mxu0 %v794
    %v1771 = vpop.f32.mrf.mxu0
    %v1772 = vadd.f32 %v1759, %v1771
    %v1773 = vpop.f32.mrf.mxu0
    %1774 = vdwg.mxu0
    %1775 = vmatpush.bf16.msra.mxu0 %v1451
    %1776 = vmatpush.bf16.msra.mxu0 %v1450
    %1777 = vmatpush.bf16.msra.mxu0 %v1449
    %1778 = vmatpush.bf16.msra.mxu0 %v1448
    %1779 = vmatpush.bf16.msra.mxu0 %v1447
    %1780 = vmatpush.bf16.msra.mxu0 %v1446
    %1781 = vmatpush.bf16.msra.mxu0 %v1445
    %1782 = vmatpush.bf16.msra.mxu0 %v1444
    %1783 = vmatmul.bf16.gmra.mxu0 %v795
    %v1784 = vpop.f32.mrf.mxu0
    %v1785 = vadd.f32 %v1772, %v1784
    %v1786 = vpop.f32.mrf.mxu0
    %1787 = vdwg.mxu0
    %1788 = vst [vmem:[#allocation3] sm:$0x3] %v1785
    %1789 = vst [vmem:[#allocation1] ss:$4 sm:$0xff] %v24
    %v1790 = vld.sshfl [vmem:[#allocation1] sm:$0xff pattern:$0x73625140]
    %v1791 = vld.sshfl [vmem:[#allocation1 + $0x8] sm:$0xff pattern:$0x73625140]
    %v1794 = vpack.c.bf16 %v1790, %v1790
    %v1795 = vpack.c.bf16 %v1791, %v1791
    %v1796 = vld [vmem:[%s3] sm:$0xf]
    %v1797 = vld [vmem:[%s3 + $0x4] sm:$0xf]
    %v1798 = vld [vmem:[%s3 + $0x8] sm:$0xf]
    %v1799 = vld [vmem:[%s3 + $0xc] sm:$0xf]
    %v1800 = vld [vmem:[%s3 + $0x10] sm:$0xf]
    %v1801 = vld [vmem:[%s3 + $0x14] sm:$0xf]
    %v1802 = vld [vmem:[%s3 + $0x18] sm:$0xf]
    %v1803 = vld [vmem:[%s3 + $0x1c] sm:$0xf]
    %v1804 = vld [vmem:[%s3 + $0x20] sm:$0xf]
    %v1805 = vld [vmem:[%s3 + $0x24] sm:$0xf]
    %v1806 = vld [vmem:[%s3 + $0x28] sm:$0xf]
    %v1807 = vld [vmem:[%s3 + $0x2c] sm:$0xf]
    %v1808 = vld [vmem:[%s3 + $0x30] sm:$0xf]
    %v1809 = vld [vmem:[%s3 + $0x34] sm:$0xf]
    %v1810 = vld [vmem:[%s3 + $0x38] sm:$0xf]
    %v1811 = vld [vmem:[%s3 + $0x3c] sm:$0xf]
    %v1812 = vld [vmem:[%s3 + $0x40] sm:$0xf]
    %v1813 = vld [vmem:[%s3 + $0x44] sm:$0xf]
    %v1814 = vld [vmem:[%s3 + $0x48] sm:$0xf]
    %v1815 = vld [vmem:[%s3 + $0x4c] sm:$0xf]
    %v1816 = vld [vmem:[%s3 + $0x50] sm:$0xf]
    %v1817 = vld [vmem:[%s3 + $0x54] sm:$0xf]
    %v1818 = vld [vmem:[%s3 + $0x58] sm:$0xf]
    %v1819 = vld [vmem:[%s3 + $0x5c] sm:$0xf]
    %v1820 = vld [vmem:[%s3 + $0x60] sm:$0xf]
    %v1821 = vld [vmem:[%s3 + $0x64] sm:$0xf]
    %v1822 = vld [vmem:[%s3 + $0x68] sm:$0xf]
    %v1823 = vld [vmem:[%s3 + $0x6c] sm:$0xf]
    %v1824 = vld [vmem:[%s3 + $0x70] sm:$0xf]
    %v1825 = vld [vmem:[%s3 + $0x74] sm:$0xf]
    %v1826 = vld [vmem:[%s3 + $0x78] sm:$0xf]
    %v1827 = vld [vmem:[%s3 + $0x7c] sm:$0xf]
    %v1828 = vld [vmem:[%s4] sm:$0x1]
    %v1830 = vperm.slane %v1828, 0
    %v1864 = vunpack.c.l.b16 %v1796
    %v1865 = vunpack.c.l.b16 %v1797
    %v1866 = vunpack.c.l.b16 %v1798
    %v1867 = vunpack.c.l.b16 %v1799
    %v1868 = vunpack.c.l.b16 %v1800
    %v1869 = vunpack.c.l.b16 %v1801
    %v1870 = vunpack.c.l.b16 %v1802
    %v1871 = vunpack.c.l.b16 %v1803
    %v1872 = vunpack.c.l.b16 %v1804
    %v1873 = vunpack.c.l.b16 %v1805
    %v1874 = vunpack.c.l.b16 %v1806
    %v1875 = vunpack.c.l.b16 %v1807
    %v1876 = vunpack.c.l.b16 %v1808
    %v1877 = vunpack.c.l.b16 %v1809
    %v1878 = vunpack.c.l.b16 %v1810
    %v1879 = vunpack.c.l.b16 %v1811
    %v1880 = vunpack.c.l.b16 %v1812
    %v1881 = vunpack.c.l.b16 %v1813
    %v1882 = vunpack.c.l.b16 %v1814
    %v1883 = vunpack.c.l.b16 %v1815
    %v1884 = vunpack.c.l.b16 %v1816
    %v1885 = vunpack.c.l.b16 %v1817
    %v1886 = vunpack.c.l.b16 %v1818
    %v1887 = vunpack.c.l.b16 %v1819
    %v1888 = vunpack.c.l.b16 %v1820
    %v1889 = vunpack.c.l.b16 %v1821
    %v1890 = vunpack.c.l.b16 %v1822
    %v1891 = vunpack.c.l.b16 %v1823
    %v1892 = vunpack.c.l.b16 %v1824
    %v1893 = vunpack.c.l.b16 %v1825
    %v1894 = vunpack.c.l.b16 %v1826
    %v1895 = vunpack.c.l.b16 %v1827
    %v1896 = vpack.c.b16 %v1865, %v1864
    %v1897 = vpack.c.b16 %v1867, %v1866
    %v1898 = vpack.c.b16 %v1869, %v1868
    %v1899 = vpack.c.b16 %v1871, %v1870
    %v1900 = vpack.c.b16 %v1873, %v1872
    %v1901 = vpack.c.b16 %v1875, %v1874
    %v1902 = vpack.c.b16 %v1877, %v1876
    %v1903 = vpack.c.b16 %v1879, %v1878
    %v1904 = vpack.c.b16 %v1881, %v1880
    %v1905 = vpack.c.b16 %v1883, %v1882
    %v1906 = vpack.c.b16 %v1885, %v1884
    %v1907 = vpack.c.b16 %v1887, %v1886
    %v1908 = vpack.c.b16 %v1889, %v1888
    %v1909 = vpack.c.b16 %v1891, %v1890
    %v1910 = vpack.c.b16 %v1893, %v1892
    %v1911 = vpack.c.b16 %v1895, %v1894
    %1928 = vmatpush.bf16.msra.mxu0 %v1903
    %1929 = vmatpush.bf16.msra.mxu0 %v1902
    %1930 = vmatpush.bf16.msra.mxu0 %v1901
    %1931 = vmatpush.bf16.msra.mxu0 %v1900
    %1932 = vmatpush.bf16.msra.mxu0 %v1899
    %1933 = vmatpush.bf16.msra.mxu0 %v1898
    %1934 = vmatpush.bf16.msra.mxu0 %v1897
    %1935 = vmatpush.bf16.msra.mxu0 %v1896
    %1936 = vmatmul.bf16.gmra.mxu0 %v1794
    %v1937 = vpop.f32.mrf.mxu0
    %v1938 = vadd.f32 %v1830, %v1937
    %v1939 = vpop.f32.mrf.mxu0
    %1940 = vdwg.mxu0
    %1941 = vmatpush.bf16.msra.mxu0 %v1911
    %1942 = vmatpush.bf16.msra.mxu0 %v1910
    %1943 = vmatpush.bf16.msra.mxu0 %v1909
    %1944 = vmatpush.bf16.msra.mxu0 %v1908
    %1945 = vmatpush.bf16.msra.mxu0 %v1907
    %1946 = vmatpush.bf16.msra.mxu0 %v1906
    %1947 = vmatpush.bf16.msra.mxu0 %v1905
    %1948 = vmatpush.bf16.msra.mxu0 %v1904
    %1949 = vmatmul.bf16.gmra.mxu0 %v1795
    %v1950 = vpop.f32.mrf.mxu0
    %v1951 = vadd.f32 %v1938, %v1950
    %v1952 = vpop.f32.mrf.mxu0
    %1953 = vdwg.mxu0
    %v1954 = vmax.f32 %v1951, 0.0
    %1955 = vst [vmem:[#allocation5] sm:$0x3] %v1954
    // Predicated region
    $region22: #{pair_selection_forward.1} parent=1 // pred_check
      _
    $region23: #{pair_selection_forward.1} parent=1 // pred_check_branch
      %1957 = sbr.rel (0) target = $region25
    $region24: #{pair_selection_forward.1} parent=1 // pred_region
      %1959 = vsyncadd [#allocation4], 0
      %s1961 = sshll.u32 [#allocation3], 4
      %s1962 = int_to_ptr.vmem [resolvable:$true] %s1961
      %s1963 = sshll.u32 %s5, 4
      %s1964 = int_to_ptr.hbm [resolvable:$true] %s1963
      %1966 = dma.vmem_to_hbm [thread:$0]  %s1962, 32, %s1964, [#allocation4]
    $region25: #{pair_selection_forward.1} parent=1 // pred_fallthru
      _
    // Predicated region
    $region26: #{pair_selection_forward.1} parent=1 // pred_check
      _
    $region27: #{pair_selection_forward.1} parent=1 // pred_check_branch
      %1968 = sbr.rel (0) target = $region29
    $region28: #{pair_selection_forward.1} parent=1 // pred_region
      %1970 = vsyncadd [#allocation6], 0
      %s1972 = sshll.u32 [#allocation5], 4
      %s1973 = int_to_ptr.vmem [resolvable:$true] %s1972
      %s1974 = sshll.u32 %s6, 4
      %s1975 = int_to_ptr.hbm [resolvable:$true] %s1974
      %1977 = dma.vmem_to_hbm [thread:$0]  %s1973, 32, %s1975, [#allocation6]
    $region29: #{pair_selection_forward.1} parent=1 // pred_fallthru
      _
    // Predicated region
    $region30: #{pair_selection_forward.1} parent=1 // pred_check
      _
    $region31: #{pair_selection_forward.1} parent=1 // pred_check_branch
      %1979 = sbr.rel (0) target = $region33
    $region32: #{pair_selection_forward.1} parent=1 // pred_region
      %1981 = dma.done [#allocation4], 32
    $region33: #{pair_selection_forward.1} parent=1 // pred_fallthru
      _
    // Predicated region
    $region34: #{pair_selection_forward.1} parent=1 // pred_check
      _
    $region35: #{pair_selection_forward.1} parent=1 // pred_check_branch
      %1983 = sbr.rel (0) target = $region37
    $region36: #{pair_selection_forward.1} parent=1 // pred_region
      %1985 = dma.done [#allocation6], 32
    $region37: #{pair_selection_forward.1} parent=1 // pred_fallthru
      _
    %1986 = vsyncpa [#allocation4], 1
    %1987 = vsyncpa [#allocation6], 1

</llo_original>
